<compile_context>
chip_gen: v5e
topology: v5e:2x2
jax: 0.10.0
libtpu: 0.0.40
codegen_flags: <defaults>
</compile_context>

<pallas_src>
import math
import numpy as np
import jax
import jax.numpy as jnp
from jax import lax
from jax.experimental import pallas as pl
from jax.experimental.pallas import tpu as pltpu

# ---- small synthetic Llama config ----
BATCH = 2
SEQ = 8
HIDDEN = 64
NUM_HEADS = 2
HEAD_DIM = HIDDEN // NUM_HEADS
INTERMEDIATE = 128
NUM_LAYERS = 2
RMS_EPS = 1e-6
ROPE_THETA = 10000.0

BS = BATCH * SEQ
QKDIM = NUM_HEADS * HEAD_DIM          # 64
HALF = HEAD_DIM // 2


def _rmsnorm(x, w, eps=RMS_EPS):
    # LlamaRMSNorm: f32 variance over last dim, then scale by weight.
    var = jnp.mean(x * x, axis=-1, keepdims=True)
    return w * (x * lax.rsqrt(var + eps))


def _rotate_half_full(t):
    """rotate_half applied per head on the fused (BS, NH*HD) slab.

    Sign of the rotated first half is folded into the host-built sin table, so
    this is a pure lane-slice permutation (no negates in the kernel).
    """
    parts = []
    for h in range(NUM_HEADS):
        base = h * HEAD_DIM
        parts.append(t[:, base + HALF: base + HEAD_DIM])
        parts.append(t[:, base: base + HALF])
    return jnp.concatenate(parts, axis=-1)


def llama_layers_kernel(x_ref, ln1_ref, wqkv_ref, wo_ref, ln2_ref, wgu_ref,
                        wd_ref, cos_ref, sin_ref, bias_ref, o_ref, h_ref):
    l = pl.program_id(0)

    # Layer 0: load the (flattened) hidden state into the VMEM carry.
    @pl.when(l == 0)
    def _():
        h_ref[...] = x_ref[...]

    x = h_ref[...]                                  # (BS, H) f32 residual stream
    cos = cos_ref[...]                              # (BS, QKDIM) f32, head-tiled
    sin = sin_ref[...]                              # (BS, QKDIM) f32, sign-folded
    bias = bias_ref[...]                            # (BS, BS) f32 additive mask

    # --- input RMSNorm ---
    hn = _rmsnorm(x, ln1_ref[0])                    # (BS, H) f32
    hb = hn.astype(jnp.bfloat16)

    # --- fused QKV projection (one wide MXU matmul; scale baked into q cols) ---
    qkv = jnp.dot(hb, wqkv_ref[0], preferred_element_type=jnp.float32)  # (BS, 3*QKDIM)
    q = qkv[:, :QKDIM]
    k = qkv[:, QKDIM:2 * QKDIM]
    v = qkv[:, 2 * QKDIM:]

    # --- RoPE over the full fused q / k slabs (hoisted out of the head loop) ---
    q = q * cos + _rotate_half_full(q) * sin
    k = k * cos + _rotate_half_full(k) * sin
    qb = q.astype(jnp.bfloat16)
    kb = k.astype(jnp.bfloat16)
    vb = v.astype(jnp.bfloat16)

    head_outs = []
    for h_i in range(NUM_HEADS):                    # static unroll over heads
        sl = slice(h_i * HEAD_DIM, (h_i + 1) * HEAD_DIM)
        s = lax.dot_general(qb[:, sl], kb[:, sl],
                            (((1,), (1,)), ((), ())),
                            preferred_element_type=jnp.float32)   # (BS, BS)
        s = s + bias                                # block-diag causal additive mask
        s = s - jnp.max(s, axis=-1, keepdims=True)
        p = jnp.exp(s)
        p = p * pl.reciprocal(jnp.sum(p, axis=-1, keepdims=True), approx=True)
        head_outs.append(jnp.dot(p.astype(jnp.bfloat16), vb[:, sl],
                                 preferred_element_type=jnp.float32))

    # --- single o_proj matmul over concatenated heads ---
    attn = jnp.dot(jnp.concatenate(head_outs, axis=-1).astype(jnp.bfloat16),
                   wo_ref[0], preferred_element_type=jnp.float32)
    x = x + attn                                    # residual 1

    # --- post-attention RMSNorm + SwiGLU MLP (fused gate/up) ---
    h2 = _rmsnorm(x, ln2_ref[0]).astype(jnp.bfloat16)
    gu = jnp.dot(h2, wgu_ref[0], preferred_element_type=jnp.float32)  # (BS, 2I)
    g = gu[:, :INTERMEDIATE]
    u = gu[:, INTERMEDIATE:]
    act = (g * jax.nn.sigmoid(g)) * u               # SiLU(g) * u, f32
    mlp = jnp.dot(act.astype(jnp.bfloat16), wd_ref[0],
                  preferred_element_type=jnp.float32)
    x = x + mlp                                     # residual 2

    h_ref[...] = x                                  # carry to next layer

    @pl.when(l == pl.num_programs(0) - 1)
    def _():
        o_ref[...] = x


def build_fused_params(layer_params):
    """Fuse QKV / o / gate-up per layer, stack over layers, cast weights to bf16."""
    scale = 1.0 / math.sqrt(HEAD_DIM)

    def fuse_qkv(p):
        qc = jnp.concatenate([p["qw"][h] for h in range(NUM_HEADS)], axis=1) * scale
        kc = jnp.concatenate([p["kw"][h] for h in range(NUM_HEADS)], axis=1)
        vc = jnp.concatenate([p["vw"][h] for h in range(NUM_HEADS)], axis=1)
        return jnp.concatenate([qc, kc, vc], axis=1)        # (H, 3*QKDIM)

    ln1 = jnp.stack([p["ln1"] for p in layer_params])                       # (L,1,H) f32
    wqkv = jnp.stack([fuse_qkv(p) for p in layer_params]).astype(jnp.bfloat16)
    wo = jnp.stack([jnp.concatenate([p["ow"][h] for h in range(NUM_HEADS)], axis=0)
                    for p in layer_params]).astype(jnp.bfloat16)            # (L,QKDIM,H)
    ln2 = jnp.stack([p["ln2"] for p in layer_params])                       # (L,1,H) f32
    wgu = jnp.stack([jnp.concatenate([p["gw"], p["uw"]], axis=1)
                     for p in layer_params]).astype(jnp.bfloat16)           # (L,H,2I)
    wd = jnp.stack([p["dw"] for p in layer_params]).astype(jnp.bfloat16)    # (L,I,H)
    return ln1, wqkv, wo, ln2, wgu, wd


def build_rope_and_mask(cos, sin, batch, seq):
    """Head-tiled cos, sign-folded head-tiled sin, and additive causal bias."""
    cos_t = jnp.tile(cos, (batch, 1))                                   # (B*S, HD)
    sin_sg = jnp.concatenate([-sin[:, :HALF], sin[:, HALF:]], axis=-1)  # fold sign
    sin_t = jnp.tile(sin_sg, (batch, 1))                                # (B*S, HD)
    cos_full = jnp.tile(cos_t, (1, NUM_HEADS))                          # (B*S, QKDIM)
    sin_full = jnp.tile(sin_t, (1, NUM_HEADS))                          # (B*S, QKDIM)

    rows = np.arange(batch * seq)
    same = (rows[:, None] // seq) == (rows[None, :] // seq)
    causal = rows[None, :] <= rows[:, None]
    bias = np.where(same & causal, 0.0, -1e30).astype(np.float32)       # (B*S, B*S)
    return cos_full, sin_full, jnp.asarray(bias)


def llama_decoder_layers(hidden, layer_params, cos, sin):
    """LlamaDecoderLayers.forward (output_attentions=False, use_cache=False).

    Returns (all_hidden_states, hidden_states, all_self_attns, next_cache).
    """
    B, S, H = hidden.shape
    L = len(layer_params)
    ln1, wqkv, wo, ln2, wgu, wd = build_fused_params(layer_params)
    cos_full, sin_full, bias = build_rope_and_mask(cos, sin, B, S)
    x = hidden.reshape(B * S, H)

    out = pl.pallas_call(
        llama_layers_kernel,
        out_shape=jax.ShapeDtypeStruct((B * S, H), jnp.float32),
        grid_spec=pltpu.PrefetchScalarGridSpec(
            num_scalar_prefetch=0,
            grid=(L,),
            in_specs=[
                pl.BlockSpec((B * S, H), lambda l: (0, 0)),                 # hidden
                pl.BlockSpec((1, 1, H), lambda l: (l, 0, 0)),               # ln1
                pl.BlockSpec((1, H, 3 * QKDIM), lambda l: (l, 0, 0)),       # wqkv
                pl.BlockSpec((1, QKDIM, H), lambda l: (l, 0, 0)),           # wo
                pl.BlockSpec((1, 1, H), lambda l: (l, 0, 0)),               # ln2
                pl.BlockSpec((1, H, 2 * INTERMEDIATE), lambda l: (l, 0, 0)),# wgu
                pl.BlockSpec((1, INTERMEDIATE, H), lambda l: (l, 0, 0)),    # wd
                pl.BlockSpec((B * S, QKDIM), lambda l: (0, 0)),             # cos (head-tiled)
                pl.BlockSpec((B * S, QKDIM), lambda l: (0, 0)),             # sin (sign-folded)
                pl.BlockSpec((B * S, B * S), lambda l: (0, 0)),             # additive mask
            ],
            out_specs=pl.BlockSpec((B * S, H), lambda l: (0, 0)),
            scratch_shapes=[pltpu.VMEM((B * S, H), jnp.float32)],
        ),
        compiler_params=pltpu.CompilerParams(
            dimension_semantics=("arbitrary",)),     # layer axis is sequential
    )(x, ln1, wqkv, wo, ln2, wgu, wd, cos_full, sin_full, bias)

    # TODO(synk): KV-cache (DynamicCache / use_cache) and cross-device (cuda:0 /
    # cuda:1) pipelining + RPC plumbing have no Pallas equivalent; not modeled.
    return (None, out.reshape(B, S, H), None, None)


# ---------------- parameter / table construction (plain JAX glue) ------------

def init_layer_params(key):
    ks = jax.random.split(key, 7)
    std = 0.02
    return {
        "ln1": jnp.ones((1, HIDDEN), jnp.float32),    # LlamaRMSNorm init: ones
        "qw": std * jax.random.normal(ks[0], (NUM_HEADS, HIDDEN, HEAD_DIM), jnp.float32),
        "kw": std * jax.random.normal(ks[1], (NUM_HEADS, HIDDEN, HEAD_DIM), jnp.float32),
        "vw": std * jax.random.normal(ks[2], (NUM_HEADS, HIDDEN, HEAD_DIM), jnp.float32),
        "ow": std * jax.random.normal(ks[3], (NUM_HEADS, HEAD_DIM, HIDDEN), jnp.float32),
        "ln2": jnp.ones((1, HIDDEN), jnp.float32),
        "gw": std * jax.random.normal(ks[4], (HIDDEN, INTERMEDIATE), jnp.float32),
        "uw": std * jax.random.normal(ks[5], (HIDDEN, INTERMEDIATE), jnp.float32),
        "dw": std * jax.random.normal(ks[6], (INTERMEDIATE, HIDDEN), jnp.float32),
    }


def rope_tables(seq, dim, theta=ROPE_THETA):
    inv_freq = 1.0 / (theta ** (np.arange(0, dim, 2, dtype=np.float32) / dim))
    pos = np.arange(seq, dtype=np.float32)
    freqs = np.outer(pos, inv_freq)                    # (S, d/2)
    emb = np.concatenate([freqs, freqs], axis=-1)      # (S, d)
    return (jnp.asarray(np.cos(emb), jnp.float32),
            jnp.asarray(np.sin(emb), jnp.float32))


# ---------------- pure-JAX reference for correctness check -------------------

def ref_decoder_layer(x, p, cos, sin):
    def rms(v, w):
        var = jnp.mean(v * v, axis=-1, keepdims=True)
        return w * (v * lax.rsqrt(var + RMS_EPS))

    def rotate_half(t):
        return jnp.concatenate([-t[..., HALF:], t[..., :HALF]], axis=-1)

    B, S, H = x.shape
    h = rms(x, p["ln1"])
    causal = jnp.asarray(np.arange(S)[None, :] <= np.arange(S)[:, None])
    scale = 1.0 / math.sqrt(HEAD_DIM)
    attn = jnp.zeros_like(x)
    for hd in range(NUM_HEADS):
        q = h @ p["qw"][hd]
        k = h @ p["kw"][hd]
        v = h @ p["vw"][hd]
        q = q * cos + rotate_half(q) * sin
        k = k * cos + rotate_half(k) * sin
        s = jnp.einsum("bqd,bkd->bqk", q, k) * scale
        s = jnp.where(causal, s, -1e30)
        w = jax.nn.softmax(s, axis=-1)
        attn = attn + jnp.einsum("bqk,bkd->bqd", w, v) @ p["ow"][hd]
    x = x + attn
    h2 = rms(x, p["ln2"])
    g = h2 @ p["gw"]
    u = h2 @ p["uw"]
    return x + (g * jax.nn.sigmoid(g) * u) @ p["dw"]


if __name__ == "__main__":
    key = jax.random.PRNGKey(0)
    keys = jax.random.split(key, NUM_LAYERS + 1)
    k_x, k_layers = keys[0], keys[1:]

    hidden = jax.random.normal(k_x, (BATCH, SEQ, HIDDEN), jnp.float32)
    layer_params = [init_layer_params(k) for k in k_layers]
    cos, sin = rope_tables(SEQ, HEAD_DIM)

    _, out, _, _ = llama_decoder_layers(hidden, layer_params, cos, sin)
    out = jax.block_until_ready(out)
    assert out.shape == (BATCH, SEQ, HIDDEN)

    # numerical check against pure-JAX f32 reference (kernel uses bf16 matmuls)
    ref = hidden
    for p in layer_params:
        ref = ref_decoder_layer(ref, p, cos, sin)
    ref = jax.block_until_ready(ref)
    np.testing.assert_allclose(np.asarray(out), np.asarray(ref),
                               rtol=2e-2, atol=2e-2)

    print("KERNEL_OK")
</pallas_src>

<mosaic_0001>
module attributes {stable_mosaic.version = 11 : i64} {
  func.func @llama_layers_kernel(%arg0: i32, %arg1: memref<16x64xf32, #tpu.memory_space<vmem>>, %arg2: memref<1x1x64xf32, #tpu.memory_space<vmem>>, %arg3: memref<1x64x192xbf16, #tpu.memory_space<vmem>>, %arg4: memref<1x64x64xbf16, #tpu.memory_space<vmem>>, %arg5: memref<1x1x64xf32, #tpu.memory_space<vmem>>, %arg6: memref<1x64x256xbf16, #tpu.memory_space<vmem>>, %arg7: memref<1x128x64xbf16, #tpu.memory_space<vmem>>, %arg8: memref<16x64xf32, #tpu.memory_space<vmem>>, %arg9: memref<16x64xf32, #tpu.memory_space<vmem>>, %arg10: memref<16x16xf32, #tpu.memory_space<vmem>>, %arg11: memref<16x64xf32, #tpu.memory_space<vmem>>, %arg12: memref<16x64xf32, #tpu.memory_space<vmem>>) attributes {dimension_semantics = [#tpu.dimension_semantics<arbitrary>], iteration_bounds = array<i64: 2>, scalar_prefetch = 0 : i64, scratch_operands = 1 : i64, tpu.core_type = #tpu.core_type<tc>, window_params = [{pipeline_mode = #tpu.pipeline_mode<synchronous>, transform_indices = @transform_0, window_bounds = array<i64: 16, 64>}, {transform_indices = @transform_1, window_bounds = array<i64: 1, 1, 64>}, {transform_indices = @transform_2, window_bounds = array<i64: 1, 64, 192>}, {transform_indices = @transform_3, window_bounds = array<i64: 1, 64, 64>}, {transform_indices = @transform_4, window_bounds = array<i64: 1, 1, 64>}, {transform_indices = @transform_5, window_bounds = array<i64: 1, 64, 256>}, {transform_indices = @transform_6, window_bounds = array<i64: 1, 128, 64>}, {pipeline_mode = #tpu.pipeline_mode<synchronous>, transform_indices = @transform_7, window_bounds = array<i64: 16, 64>}, {pipeline_mode = #tpu.pipeline_mode<synchronous>, transform_indices = @transform_8, window_bounds = array<i64: 16, 64>}, {pipeline_mode = #tpu.pipeline_mode<synchronous>, transform_indices = @transform_9, window_bounds = array<i64: 16, 16>}, {pipeline_mode = #tpu.pipeline_mode<synchronous>, transform_indices = @transform_10, window_bounds = array<i64: 16, 64>}]} {
    %c0_i32 = arith.constant 0 : i32
    %0 = arith.cmpi eq, %arg0, %c0_i32 : i32
    %1 = arith.extui %0 : i1 to i32
    %c0_i32_0 = arith.constant 0 : i32
    %2 = arith.cmpi ne, %1, %c0_i32_0 : i32
    scf.if %2 {
      %c0_47 = arith.constant 0 : index
      %c0_48 = arith.constant 0 : index
      %123 = vector.load %arg1[%c0_47, %c0_48] : memref<16x64xf32, #tpu.memory_space<vmem>>, vector<16x64xf32>
      %c0_49 = arith.constant 0 : index
      %c0_50 = arith.constant 0 : index
      %124 = vector.load %arg12[%c0_49, %c0_50] : memref<16x64xf32, #tpu.memory_space<vmem>>, vector<16x64xf32>
      tpu.vector_store %arg12[%c0_49, %c0_50], %123 {strides = array<i32>} : memref<16x64xf32, #tpu.memory_space<vmem>>, vector<16x64xf32>,
    } else {
    }
    %c0 = arith.constant 0 : index
    %c0_1 = arith.constant 0 : index
    %3 = vector.load %arg12[%c0, %c0_1] : memref<16x64xf32, #tpu.memory_space<vmem>>, vector<16x64xf32>
    %c0_2 = arith.constant 0 : index
    %c0_3 = arith.constant 0 : index
    %4 = vector.load %arg8[%c0_2, %c0_3] : memref<16x64xf32, #tpu.memory_space<vmem>>, vector<16x64xf32>
    %c0_4 = arith.constant 0 : index
    %c0_5 = arith.constant 0 : index
    %5 = vector.load %arg9[%c0_4, %c0_5] : memref<16x64xf32, #tpu.memory_space<vmem>>, vector<16x64xf32>
    %c0_6 = arith.constant 0 : index
    %c0_7 = arith.constant 0 : index
    %6 = vector.load %arg10[%c0_6, %c0_7] : memref<16x16xf32, #tpu.memory_space<vmem>>, vector<16x16xf32>
    %c0_8 = arith.constant 0 : index
    %c0_9 = arith.constant 0 : index
    %c0_10 = arith.constant 0 : index
    %7 = vector.load %arg2[%c0_8, %c0_9, %c0_10] : memref<1x1x64xf32, #tpu.memory_space<vmem>>, vector<1x1x64xf32>
    %8 = vector.shape_cast %7 : vector<1x1x64xf32> to vector<1x64xf32>
    %9 = arith.mulf %3, %3 : vector<16x64xf32>
    %cst = arith.constant dense<0.000000e+00> : vector<16xf32>
    %10 = vector.multi_reduction <add>, %9, %cst [1] : vector<16x64xf32> to vector<16xf32>
    %11 = vector.shape_cast %10 : vector<16xf32> to vector<16x1xf32>
    %cst_11 = arith.constant 6.400000e+01 : f32
    %12 = vector.broadcast %cst_11 : f32 to vector<16x1xf32>
    %13 = arith.divf %11, %12 : vector<16x1xf32>
    %cst_12 = arith.constant 9.99999997E-7 : f32
    %14 = vector.broadcast %cst_12 : f32 to vector<16x1xf32>
    %15 = arith.addf %13, %14 : vector<16x1xf32>
    %16 = math.rsqrt %15 : vector<16x1xf32>
    %17 = vector.broadcast %16 : vector<16x1xf32> to vector<16x64xf32>
    %18 = arith.mulf %3, %17 : vector<16x64xf32>
    %19 = vector.broadcast %8 : vector<1x64xf32> to vector<16x64xf32>
    %20 = arith.mulf %19, %18 : vector<16x64xf32>
    %21 = arith.truncf %20 : vector<16x64xf32> to vector<16x64xbf16>
    %c0_13 = arith.constant 0 : index
    %c0_14 = arith.constant 0 : index
    %c0_15 = arith.constant 0 : index
    %22 = vector.load %arg3[%c0_13, %c0_14, %c0_15] : memref<1x64x192xbf16, #tpu.memory_space<vmem>>, vector<1x64x192xbf16>
    %23 = vector.shape_cast %22 : vector<1x64x192xbf16> to vector<64x192xbf16>
    %cst_16 = arith.constant dense<0.000000e+00> : vector<16x192xf32>
    %24 = tpu.matmul %21, %23, %cst_16 {dimension_numbers = #tpu.dot_dimension_numbers<[1], [0], [0], [1], [0, 0, 1, 1], [], []>} : vector<16x64xbf16>, vector<64x192xbf16>, vector<16x192xf32> -> vector<16x192xf32>
    %25 = vector.extract_strided_slice %24 {offsets = [0, 0], sizes = [16, 64], strides = [1, 1]} : vector<16x192xf32> to vector<16x64xf32>
    %26 = vector.extract_strided_slice %24 {offsets = [0, 64], sizes = [16, 64], strides = [1, 1]} : vector<16x192xf32> to vector<16x64xf32>
    %27 = vector.extract_strided_slice %24 {offsets = [0, 128], sizes = [16, 64], strides = [1, 1]} : vector<16x192xf32> to vector<16x64xf32>
    %28 = arith.mulf %25, %4 : vector<16x64xf32>
    %29 = vector.extract_strided_slice %25 {offsets = [0, 16], sizes = [16, 16], strides = [1, 1]} : vector<16x64xf32> to vector<16x16xf32>
    %30 = vector.extract_strided_slice %25 {offsets = [0, 0], sizes = [16, 16], strides = [1, 1]} : vector<16x64xf32> to vector<16x16xf32>
    %31 = vector.extract_strided_slice %25 {offsets = [0, 48], sizes = [16, 16], strides = [1, 1]} : vector<16x64xf32> to vector<16x16xf32>
    %32 = vector.extract_strided_slice %25 {offsets = [0, 32], sizes = [16, 16], strides = [1, 1]} : vector<16x64xf32> to vector<16x16xf32>
    %33 = tpu.concatenate %29, %30, %31, %32 in 1 : vector<16x16xf32>, vector<16x16xf32>, vector<16x16xf32>, vector<16x16xf32> -> vector<16x64xf32>
    %34 = arith.mulf %33, %5 : vector<16x64xf32>
    %35 = arith.addf %28, %34 : vector<16x64xf32>
    %36 = arith.mulf %26, %4 : vector<16x64xf32>
    %37 = vector.extract_strided_slice %26 {offsets = [0, 16], sizes = [16, 16], strides = [1, 1]} : vector<16x64xf32> to vector<16x16xf32>
    %38 = vector.extract_strided_slice %26 {offsets = [0, 0], sizes = [16, 16], strides = [1, 1]} : vector<16x64xf32> to vector<16x16xf32>
    %39 = vector.extract_strided_slice %26 {offsets = [0, 48], sizes = [16, 16], strides = [1, 1]} : vector<16x64xf32> to vector<16x16xf32>
    %40 = vector.extract_strided_slice %26 {offsets = [0, 32], sizes = [16, 16], strides = [1, 1]} : vector<16x64xf32> to vector<16x16xf32>
    %41 = tpu.concatenate %37, %38, %39, %40 in 1 : vector<16x16xf32>, vector<16x16xf32>, vector<16x16xf32>, vector<16x16xf32> -> vector<16x64xf32>
    %42 = arith.mulf %41, %5 : vector<16x64xf32>
    %43 = arith.addf %36, %42 : vector<16x64xf32>
    %44 = arith.truncf %35 : vector<16x64xf32> to vector<16x64xbf16>
    %45 = arith.truncf %43 : vector<16x64xf32> to vector<16x64xbf16>
    %46 = arith.truncf %27 : vector<16x64xf32> to vector<16x64xbf16>
    %47 = vector.extract_strided_slice %44 {offsets = [0, 0], sizes = [16, 32], strides = [1, 1]} : vector<16x64xbf16> to vector<16x32xbf16>
    %48 = vector.extract_strided_slice %45 {offsets = [0, 0], sizes = [16, 32], strides = [1, 1]} : vector<16x64xbf16> to vector<16x32xbf16>
    %cst_17 = arith.constant dense<0.000000e+00> : vector<16x16xf32>
    %49 = tpu.matmul %47, %48, %cst_17 {dimension_numbers = #tpu.dot_dimension_numbers<[1], [1], [0], [0], [0, 0, 1, 0], [], []>} : vector<16x32xbf16>, vector<16x32xbf16>, vector<16x16xf32> -> vector<16x16xf32>
    %50 = arith.addf %49, %6 : vector<16x16xf32>
    %cst_18 = arith.constant dense<0xFF800000> : vector<16xf32>
    %51 = vector.multi_reduction <maximumf>, %50, %cst_18 [1] : vector<16x16xf32> to vector<16xf32>
    %52 = vector.shape_cast %51 : vector<16xf32> to vector<16x1xf32>
    %53 = vector.broadcast %52 : vector<16x1xf32> to vector<16x16xf32>
    %54 = arith.subf %50, %53 : vector<16x16xf32>
    %55 = math.exp %54 : vector<16x16xf32>
    %cst_19 = arith.constant dense<0.000000e+00> : vector<16xf32>
    %56 = vector.multi_reduction <add>, %55, %cst_19 [1] : vector<16x16xf32> to vector<16xf32>
    %57 = vector.shape_cast %56 : vector<16xf32> to vector<16x1xf32>
    %58 = tpu.reciprocal %57 {approx = true} : vector<16x1xf32> -> vector<16x1xf32>
    %59 = vector.broadcast %58 : vector<16x1xf32> to vector<16x16xf32>
    %60 = arith.mulf %55, %59 : vector<16x16xf32>
    %61 = arith.truncf %60 : vector<16x16xf32> to vector<16x16xbf16>
    %62 = vector.extract_strided_slice %46 {offsets = [0, 0], sizes = [16, 32], strides = [1, 1]} : vector<16x64xbf16> to vector<16x32xbf16>
    %cst_20 = arith.constant dense<0.000000e+00> : vector<16x32xf32>
    %63 = tpu.matmul %61, %62, %cst_20 {dimension_numbers = #tpu.dot_dimension_numbers<[1], [0], [0], [1], [0, 0, 1, 1], [], []>} : vector<16x16xbf16>, vector<16x32xbf16>, vector<16x32xf32> -> vector<16x32xf32>
    %64 = vector.extract_strided_slice %44 {offsets = [0, 32], sizes = [16, 32], strides = [1, 1]} : vector<16x64xbf16> to vector<16x32xbf16>
    %65 = vector.extract_strided_slice %45 {offsets = [0, 32], sizes = [16, 32], strides = [1, 1]} : vector<16x64xbf16> to vector<16x32xbf16>
    %cst_21 = arith.constant dense<0.000000e+00> : vector<16x16xf32>
    %66 = tpu.matmul %64, %65, %cst_21 {dimension_numbers = #tpu.dot_dimension_numbers<[1], [1], [0], [0], [0, 0, 1, 0], [], []>} : vector<16x32xbf16>, vector<16x32xbf16>, vector<16x16xf32> -> vector<16x16xf32>
    %67 = arith.addf %66, %6 : vector<16x16xf32>
    %cst_22 = arith.constant dense<0xFF800000> : vector<16xf32>
    %68 = vector.multi_reduction <maximumf>, %67, %cst_22 [1] : vector<16x16xf32> to vector<16xf32>
    %69 = vector.shape_cast %68 : vector<16xf32> to vector<16x1xf32>
    %70 = vector.broadcast %69 : vector<16x1xf32> to vector<16x16xf32>
    %71 = arith.subf %67, %70 : vector<16x16xf32>
    %72 = math.exp %71 : vector<16x16xf32>
    %cst_23 = arith.constant dense<0.000000e+00> : vector<16xf32>
    %73 = vector.multi_reduction <add>, %72, %cst_23 [1] : vector<16x16xf32> to vector<16xf32>
    %74 = vector.shape_cast %73 : vector<16xf32> to vector<16x1xf32>
    %75 = tpu.reciprocal %74 {approx = true} : vector<16x1xf32> -> vector<16x1xf32>
    %76 = vector.broadcast %75 : vector<16x1xf32> to vector<16x16xf32>
    %77 = arith.mulf %72, %76 : vector<16x16xf32>
    %78 = arith.truncf %77 : vector<16x16xf32> to vector<16x16xbf16>
    %79 = vector.extract_strided_slice %46 {offsets = [0, 32], sizes = [16, 32], strides = [1, 1]} : vector<16x64xbf16> to vector<16x32xbf16>
    %cst_24 = arith.constant dense<0.000000e+00> : vector<16x32xf32>
    %80 = tpu.matmul %78, %79, %cst_24 {dimension_numbers = #tpu.dot_dimension_numbers<[1], [0], [0], [1], [0, 0, 1, 1], [], []>} : vector<16x16xbf16>, vector<16x32xbf16>, vector<16x32xf32> -> vector<16x32xf32>
    %81 = tpu.concatenate %63, %80 in 1 : vector<16x32xf32>, vector<16x32xf32> -> vector<16x64xf32>
    %82 = arith.truncf %81 : vector<16x64xf32> to vector<16x64xbf16>
    %c0_25 = arith.constant 0 : index
    %c0_26 = arith.constant 0 : index
    %c0_27 = arith.constant 0 : index
    %83 = vector.load %arg4[%c0_25, %c0_26, %c0_27] : memref<1x64x64xbf16, #tpu.memory_space<vmem>>, vector<1x64x64xbf16>
    %84 = vector.shape_cast %83 : vector<1x64x64xbf16> to vector<64x64xbf16>
    %cst_28 = arith.constant dense<0.000000e+00> : vector<16x64xf32>
    %85 = tpu.matmul %82, %84, %cst_28 {dimension_numbers = #tpu.dot_dimension_numbers<[1], [0], [0], [1], [0, 0, 1, 1], [], []>} : vector<16x64xbf16>, vector<64x64xbf16>, vector<16x64xf32> -> vector<16x64xf32>
    %86 = arith.addf %3, %85 : vector<16x64xf32>
    %c0_29 = arith.constant 0 : index
    %c0_30 = arith.constant 0 : index
    %c0_31 = arith.constant 0 : index
    %87 = vector.load %arg5[%c0_29, %c0_30, %c0_31] : memref<1x1x64xf32, #tpu.memory_space<vmem>>, vector<1x1x64xf32>
    %88 = vector.shape_cast %87 : vector<1x1x64xf32> to vector<1x64xf32>
    %89 = arith.mulf %86, %86 : vector<16x64xf32>
    %cst_32 = arith.constant dense<0.000000e+00> : vector<16xf32>
    %90 = vector.multi_reduction <add>, %89, %cst_32 [1] : vector<16x64xf32> to vector<16xf32>
    %91 = vector.shape_cast %90 : vector<16xf32> to vector<16x1xf32>
    %cst_33 = arith.constant 6.400000e+01 : f32
    %92 = vector.broadcast %cst_33 : f32 to vector<16x1xf32>
    %93 = arith.divf %91, %92 : vector<16x1xf32>
    %cst_34 = arith.constant 9.99999997E-7 : f32
    %94 = vector.broadcast %cst_34 : f32 to vector<16x1xf32>
    %95 = arith.addf %93, %94 : vector<16x1xf32>
    %96 = math.rsqrt %95 : vector<16x1xf32>
    %97 = vector.broadcast %96 : vector<16x1xf32> to vector<16x64xf32>
    %98 = arith.mulf %86, %97 : vector<16x64xf32>
    %99 = vector.broadcast %88 : vector<1x64xf32> to vector<16x64xf32>
    %100 = arith.mulf %99, %98 : vector<16x64xf32>
    %101 = arith.truncf %100 : vector<16x64xf32> to vector<16x64xbf16>
    %c0_35 = arith.constant 0 : index
    %c0_36 = arith.constant 0 : index
    %c0_37 = arith.constant 0 : index
    %102 = vector.load %arg6[%c0_35, %c0_36, %c0_37] : memref<1x64x256xbf16, #tpu.memory_space<vmem>>, vector<1x64x256xbf16>
    %103 = vector.shape_cast %102 : vector<1x64x256xbf16> to vector<64x256xbf16>
    %cst_38 = arith.constant dense<0.000000e+00> : vector<16x256xf32>
    %104 = tpu.matmul %101, %103, %cst_38 {dimension_numbers = #tpu.dot_dimension_numbers<[1], [0], [0], [1], [0, 0, 1, 1], [], []>} : vector<16x64xbf16>, vector<64x256xbf16>, vector<16x256xf32> -> vector<16x256xf32>
    %105 = vector.extract_strided_slice %104 {offsets = [0, 0], sizes = [16, 128], strides = [1, 1]} : vector<16x256xf32> to vector<16x128xf32>
    %106 = vector.extract_strided_slice %104 {offsets = [0, 128], sizes = [16, 128], strides = [1, 1]} : vector<16x256xf32> to vector<16x128xf32>
    %107 = arith.negf %105 : vector<16x128xf32>
    %108 = math.exp %107 : vector<16x128xf32>
    %cst_39 = arith.constant 1.000000e+00 : f32
    %109 = vector.broadcast %cst_39 : f32 to vector<16x128xf32>
    %110 = arith.addf %109, %108 : vector<16x128xf32>
    %111 = arith.divf %109, %110 : vector<16x128xf32>
    %112 = arith.mulf %105, %111 : vector<16x128xf32>
    %113 = arith.mulf %112, %106 : vector<16x128xf32>
    %114 = arith.truncf %113 : vector<16x128xf32> to vector<16x128xbf16>
    %c0_40 = arith.constant 0 : index
    %c0_41 = arith.constant 0 : index
    %c0_42 = arith.constant 0 : index
    %115 = vector.load %arg7[%c0_40, %c0_41, %c0_42] : memref<1x128x64xbf16, #tpu.memory_space<vmem>>, vector<1x128x64xbf16>
    %116 = vector.shape_cast %115 : vector<1x128x64xbf16> to vector<128x64xbf16>
    %cst_43 = arith.constant dense<0.000000e+00> : vector<16x64xf32>
    %117 = tpu.matmul %114, %116, %cst_43 {dimension_numbers = #tpu.dot_dimension_numbers<[1], [0], [0], [1], [0, 0, 1, 1], [], []>} : vector<16x128xbf16>, vector<128x64xbf16>, vector<16x64xf32> -> vector<16x64xf32>
    %118 = arith.addf %86, %117 : vector<16x64xf32>
    %c0_44 = arith.constant 0 : index
    %c0_45 = arith.constant 0 : index
    %119 = vector.load %arg12[%c0_44, %c0_45] : memref<16x64xf32, #tpu.memory_space<vmem>>, vector<16x64xf32>
    tpu.vector_store %arg12[%c0_44, %c0_45], %118 {strides = array<i32>} : memref<16x64xf32, #tpu.memory_space<vmem>>, vector<16x64xf32>,
    %c1_i32 = arith.constant 1 : i32
    %120 = arith.cmpi eq, %arg0, %c1_i32 : i32
    %121 = arith.extui %120 : i1 to i32
    %c0_i32_46 = arith.constant 0 : i32
    %122 = arith.cmpi ne, %121, %c0_i32_46 : i32
    scf.if %122 {
      %c0_47 = arith.constant 0 : index
      %c0_48 = arith.constant 0 : index
      %123 = vector.load %arg11[%c0_47, %c0_48] : memref<16x64xf32, #tpu.memory_space<vmem>>, vector<16x64xf32>
      tpu.vector_store %arg11[%c0_47, %c0_48], %118 {strides = array<i32>} : memref<16x64xf32, #tpu.memory_space<vmem>>, vector<16x64xf32>,
    } else {
    }
    return
  }
  func.func @transform_0(%arg0: i32) -> (i32, i32) {
    %c0_i32 = arith.constant 0 : i32
    %c0_i32_0 = arith.constant 0 : i32
    %c0_i32_1 = arith.constant 0 : i32
    return %c0_i32, %c0_i32_0 : i32, i32
  }
  func.func @transform_1(%arg0: i32) -> (i32, i32, i32) {
    %c0_i32 = arith.constant 0 : i32
    %c0_i32_0 = arith.constant 0 : i32
    %c0_i32_1 = arith.constant 0 : i32
    return %arg0, %c0_i32, %c0_i32_0 : i32, i32, i32
  }
  func.func @transform_2(%arg0: i32) -> (i32, i32, i32) {
    %c0_i32 = arith.constant 0 : i32
    %c0_i32_0 = arith.constant 0 : i32
    %c0_i32_1 = arith.constant 0 : i32
    return %arg0, %c0_i32, %c0_i32_0 : i32, i32, i32
  }
  func.func @transform_3(%arg0: i32) -> (i32, i32, i32) {
    %c0_i32 = arith.constant 0 : i32
    %c0_i32_0 = arith.constant 0 : i32
    %c0_i32_1 = arith.constant 0 : i32
    return %arg0, %c0_i32, %c0_i32_0 : i32, i32, i32
  }
  func.func @transform_4(%arg0: i32) -> (i32, i32, i32) {
    %c0_i32 = arith.constant 0 : i32
    %c0_i32_0 = arith.constant 0 : i32
    %c0_i32_1 = arith.constant 0 : i32
    return %arg0, %c0_i32, %c0_i32_0 : i32, i32, i32
  }
  func.func @transform_5(%arg0: i32) -> (i32, i32, i32) {
    %c0_i32 = arith.constant 0 : i32
    %c0_i32_0 = arith.constant 0 : i32
    %c0_i32_1 = arith.constant 0 : i32
    return %arg0, %c0_i32, %c0_i32_0 : i32, i32, i32
  }
  func.func @transform_6(%arg0: i32) -> (i32, i32, i32) {
    %c0_i32 = arith.constant 0 : i32
    %c0_i32_0 = arith.constant 0 : i32
    %c0_i32_1 = arith.constant 0 : i32
    return %arg0, %c0_i32, %c0_i32_0 : i32, i32, i32
  }
  func.func @transform_7(%arg0: i32) -> (i32, i32) {
    %c0_i32 = arith.constant 0 : i32
    %c0_i32_0 = arith.constant 0 : i32
    %c0_i32_1 = arith.constant 0 : i32
    return %c0_i32, %c0_i32_0 : i32, i32
  }
  func.func @transform_8(%arg0: i32) -> (i32, i32) {
    %c0_i32 = arith.constant 0 : i32
    %c0_i32_0 = arith.constant 0 : i32
    %c0_i32_1 = arith.constant 0 : i32
    return %c0_i32, %c0_i32_0 : i32, i32
  }
  func.func @transform_9(%arg0: i32) -> (i32, i32) {
    %c0_i32 = arith.constant 0 : i32
    %c0_i32_0 = arith.constant 0 : i32
    %c0_i32_1 = arith.constant 0 : i32
    return %c0_i32, %c0_i32_0 : i32, i32
  }
  func.func @transform_10(%arg0: i32) -> (i32, i32) {
    %c0_i32 = arith.constant 0 : i32
    %c0_i32_0 = arith.constant 0 : i32
    %c0_i32_1 = arith.constant 0 : i32
    return %c0_i32, %c0_i32_0 : i32, i32
  }
}

</mosaic_0001>

<llo_original>
// kernel: tpu_custom_call.1
$region0: #{tpu_custom_call.1}
  #allocation0 [shape = 'u32[]', space=smem, size = 0x4, offset = 0x4, fixed_abs, tag = 'smem constant byte address 0x4 - core index']
  #allocation1 [shape = 'u32[72,128]{1,0:T(1,128)}', space=vmem, size = 0x9000, scoped, tag = 'internal scratch']
  #allocation2 [shape = 'f32[16,64]{1,0:T(8,128)}', space=vmem, size = 0x2000, scoped, tag = 'scratch operand']
  %s0 = inlined_call_operand.hbm [shape: f32[16,64], index: 0, kind: input, shape index: {}]
  %s1 = inlined_call_operand.hbm [shape: f32[2,1,64], index: 1, kind: input, shape index: {}]
  %s2 = inlined_call_operand.vmem [shape: bf16[2,64,192], index: 2, kind: input, shape index: {}]
  %s3 = inlined_call_operand.vmem [shape: bf16[2,64,64], index: 3, kind: input, shape index: {}]
  %s4 = inlined_call_operand.vmem [shape: f32[2,1,64], index: 4, kind: input, shape index: {}]
  %s5 = inlined_call_operand.hbm [shape: bf16[2,64,256], index: 5, kind: input, shape index: {}]
  %s6 = inlined_call_operand.vmem [shape: bf16[2,128,64], index: 6, kind: input, shape index: {}]
  %s7 = inlined_call_operand.hbm [shape: f32[16,64], index: 7, kind: input, shape index: {}]
  %s8 = inlined_call_operand.hbm [shape: f32[16,64], index: 8, kind: input, shape index: {}]
  %s9 = inlined_call_operand.hbm [shape: f32[16,16], index: 9, kind: input, shape index: {}]
  %s10 = inlined_call_operand.hbm [shape: f32[16,64], index: 10, kind: output, shape index: {}]
  %s11 = sld [smem:[#allocation0]]
  $region105: #{tpu_custom_call.1} parent=0
    _
  %s13 = ssub.s32 1, %s11
  %s14 = scalar_select 0, %s13, %s11
  $region1: #{tpu_custom_call.1} parent=0
    #allocation3 [shape = 'u8[8192]{0}', space=vmem, size = 0x2000, scoped, tag = 'input window, operand 0, single buffered']
    #allocation4 [shape = 's32[2]{0}', space=sflag, size = 0x8, scoped, tag = 'scoped memory for tpu_custom_call.1']
    #allocation5 [shape = 's32[2]{0}', space=sflag, size = 0x8, scoped, tag = 'scoped memory for tpu_custom_call.1']
    #allocation6 [shape = 'u8[1024]{0}', space=vmem, size = 0x400, scoped, tag = 'input window, operand 1']
    #allocation7 [shape = 's32[2]{0}', space=sflag, size = 0x8, scoped, tag = 'scoped memory for tpu_custom_call.1']
    #allocation8 [shape = 'u8[65536]{0}', space=vmem, size = 0x10000, scoped, tag = 'input window, operand 5']
    #allocation9 [shape = 'u8[8192]{0}', space=vmem, size = 0x2000, scoped, tag = 'input window, operand 7, single buffered']
    #allocation10 [shape = 's32[1]{0}', space=sflag, size = 0x4, scoped, tag = 'scoped memory for tpu_custom_call.1']
    #allocation11 [shape = 'u8[8192]{0}', space=vmem, size = 0x2000, scoped, tag = 'input window, operand 8, single buffered']
    #allocation12 [shape = 'u8[8192]{0}', space=vmem, size = 0x2000, scoped, tag = 'input window, operand 9, single buffered']
    #allocation13 [shape = 's32[1]{0}', space=sflag, size = 0x4, scoped, tag = 'scoped memory for tpu_custom_call.1']
    #allocation14 [shape = 'u8[8192]{0}', space=vmem, size = 0x2000, scoped, tag = 'output window, operand 0, single buffered']
    %15 = vsyncpa [#allocation4], 0
    %16 = vsyncpa [#allocation7], 0
    %s17 = scalar_lea.sflag [#allocation7], 1
    %18 = vsyncpa %s17, 0
    %19 = vsyncpa [#allocation10], 0
    %20 = vsyncpa [#allocation13], 0
    %21 = vsyncpa [#allocation5], 0
    loop: start=0, step=1, limit=4
    $region2: #{tpu_custom_call.1} parent=1 // loop_pre_header
      _
    $region3: #{tpu_custom_call.1} parent=1 // loop_header
      %s23 = sphi 0, %s27
      %p24 = scmp.ge.s32.totalorder %s23, 4
      %s31 = sphi 0, %s31
      %s33 = sphi 0, %s31
      %s34 = sphi 0, %s33
      %s48 = sphi 0, %s34
      %s54 = sphi 0, %s56
      %s57 = sphi 0, %s54
      %s58 = sphi 0, %s57
      %s74 = sphi 0, %s58
      %s80 = sphi 0, %s82
      %s83 = sphi 0, %s80
      %s84 = sphi 0, %s83
      %s100 = sphi 0, %s84
      %s106 = sphi 0, %s108
      %s109 = sphi 0, %s106
      %s110 = sphi 0, %s109
      %s126 = sphi 0, %s110
      %s132 = sphi 0, %s134
      %s135 = sphi 0, %s132
      %s136 = sphi 0, %s135
      %s152 = sphi 0, %s136
      %s158 = sphi 0, %s160
      %s161 = sphi 0, %s158
      %s162 = sphi 0, %s161
      %s178 = sphi 0, %s162
      %s184 = sphi 0, %s186
      %s187 = sphi 0, %s184
      %s188 = sphi 0, %s187
      %s204 = sphi 0, %s188
      %s208 = sphi 0, %s208
      %s210 = sphi 0, %s208
      %s211 = sphi 0, %s210
      %s225 = sphi 0, %s211
      %s229 = sphi 0, %s229
      %s231 = sphi 0, %s229
      %s232 = sphi 0, %s231
      %s246 = sphi 0, %s232
      %s250 = sphi 0, %s250
      %s252 = sphi 0, %s250
      %s253 = sphi 0, %s252
      %s267 = sphi 0, %s253
      %s271 = sphi 0, %s271
      %s273 = sphi 0, %s271
      %s274 = sphi 0, %s273
      %s288 = sphi 0, %s274
    $region4: #{tpu_custom_call.1} parent=1 // loop_header_branch
      %26 = sbr.rel (%p24) target = $region8
    $region5: #{tpu_custom_call.1} parent=1 // loop_body
      %s28 = ssub.s32 %s23, 1
      %s29 = ssub.s32 %s23, 2
      %s30 = sadd.s32 %s23, 1
      %s32 = sadd.s32 %s31, 1
      %p35 = scmp.eq.s32.totalorder %s23, 1
      %p36 = scmp.ne.s32.totalorder %s31, %s33
      %p37 = scmp.eq.s32.totalorder %s23, 0
      %p38 = por %p36, %p37
      %p39 = scmp.ne.s32.totalorder %s31, %s33
      %p40 = scmp.eq.s32.totalorder %s28, 1
      %p41 = por %p39, %p40
      %p42 = scmp.ne.s32.totalorder %s33, %s34
      %p43 = scmp.eq.s32.totalorder %s28, 0
      %p44 = por %p42, %p43
      %p45 = scmp.ne.s32.totalorder %s33, %s34
      %p46 = scmp.eq.s32.totalorder %s29, 1
      %p47 = por %p45, %p46
      %p49 = scmp.ne.s32.totalorder %s34, %s48
      %p50 = scmp.eq.s32.totalorder %s29, 0
      %p51 = por %p49, %p50
      %s52 = ssub.s32 %s23, %s30
      %p53 = scmp.eq.s32.totalorder %s52, 0
      %s55 = sadd.s32 %s54, 1
      %s56 = scalar_select %p53, %s54, %s55
      %p59 = pneg %p53
      %p60 = scmp.eq.s32.totalorder %s23, 1
      %p61 = por %p59, %p60
      %p62 = scmp.ne.s32.totalorder %s54, %s57
      %p63 = scmp.eq.s32.totalorder %s23, 0
      %p64 = por %p62, %p63
      %p65 = scmp.ne.s32.totalorder %s54, %s57
      %p66 = scmp.eq.s32.totalorder %s28, 1
      %p67 = por %p65, %p66
      %p68 = scmp.ne.s32.totalorder %s57, %s58
      %p69 = scmp.eq.s32.totalorder %s28, 0
      %p70 = por %p68, %p69
      %p71 = scmp.ne.s32.totalorder %s57, %s58
      %p72 = scmp.eq.s32.totalorder %s29, 1
      %p73 = por %p71, %p72
      %p75 = scmp.ne.s32.totalorder %s58, %s74
      %p76 = scmp.eq.s32.totalorder %s29, 0
      %p77 = por %p75, %p76
      %s78 = ssub.s32 %s23, %s30
      %p79 = scmp.eq.s32.totalorder %s78, 0
      %s81 = sadd.s32 %s80, 1
      %s82 = scalar_select %p79, %s80, %s81
      %p85 = pneg %p79
      %p86 = scmp.eq.s32.totalorder %s23, 1
      %p87 = por %p85, %p86
      %p88 = scmp.ne.s32.totalorder %s80, %s83
      %p89 = scmp.eq.s32.totalorder %s23, 0
      %p90 = por %p88, %p89
      %p91 = scmp.ne.s32.totalorder %s80, %s83
      %p92 = scmp.eq.s32.totalorder %s28, 1
      %p93 = por %p91, %p92
      %p94 = scmp.ne.s32.totalorder %s83, %s84
      %p95 = scmp.eq.s32.totalorder %s28, 0
      %p96 = por %p94, %p95
      %p97 = scmp.ne.s32.totalorder %s83, %s84
      %p98 = scmp.eq.s32.totalorder %s29, 1
      %p99 = por %p97, %p98
      %p101 = scmp.ne.s32.totalorder %s84, %s100
      %p102 = scmp.eq.s32.totalorder %s29, 0
      %p103 = por %p101, %p102
      %s104 = ssub.s32 %s23, %s30
      %p105 = scmp.eq.s32.totalorder %s104, 0
      %s107 = sadd.s32 %s106, 1
      %s108 = scalar_select %p105, %s106, %s107
      %p111 = pneg %p105
      %p112 = scmp.eq.s32.totalorder %s23, 1
      %p113 = por %p111, %p112
      %p114 = scmp.ne.s32.totalorder %s106, %s109
      %p115 = scmp.eq.s32.totalorder %s23, 0
      %p116 = por %p114, %p115
      %p117 = scmp.ne.s32.totalorder %s106, %s109
      %p118 = scmp.eq.s32.totalorder %s28, 1
      %p119 = por %p117, %p118
      %p120 = scmp.ne.s32.totalorder %s109, %s110
      %p121 = scmp.eq.s32.totalorder %s28, 0
      %p122 = por %p120, %p121
      %p123 = scmp.ne.s32.totalorder %s109, %s110
      %p124 = scmp.eq.s32.totalorder %s29, 1
      %p125 = por %p123, %p124
      %p127 = scmp.ne.s32.totalorder %s110, %s126
      %p128 = scmp.eq.s32.totalorder %s29, 0
      %p129 = por %p127, %p128
      %s130 = ssub.s32 %s23, %s30
      %p131 = scmp.eq.s32.totalorder %s130, 0
      %s133 = sadd.s32 %s132, 1
      %s134 = scalar_select %p131, %s132, %s133
      %p137 = pneg %p131
      %p138 = scmp.eq.s32.totalorder %s23, 1
      %p139 = por %p137, %p138
      %p140 = scmp.ne.s32.totalorder %s132, %s135
      %p141 = scmp.eq.s32.totalorder %s23, 0
      %p142 = por %p140, %p141
      %p143 = scmp.ne.s32.totalorder %s132, %s135
      %p144 = scmp.eq.s32.totalorder %s28, 1
      %p145 = por %p143, %p144
      %p146 = scmp.ne.s32.totalorder %s135, %s136
      %p147 = scmp.eq.s32.totalorder %s28, 0
      %p148 = por %p146, %p147
      %p149 = scmp.ne.s32.totalorder %s135, %s136
      %p150 = scmp.eq.s32.totalorder %s29, 1
      %p151 = por %p149, %p150
      %p153 = scmp.ne.s32.totalorder %s136, %s152
      %p154 = scmp.eq.s32.totalorder %s29, 0
      %p155 = por %p153, %p154
      %s156 = ssub.s32 %s23, %s30
      %p157 = scmp.eq.s32.totalorder %s156, 0
      %s159 = sadd.s32 %s158, 1
      %s160 = scalar_select %p157, %s158, %s159
      %p163 = pneg %p157
      %p164 = scmp.eq.s32.totalorder %s23, 1
      %p165 = por %p163, %p164
      %p166 = scmp.ne.s32.totalorder %s158, %s161
      %p167 = scmp.eq.s32.totalorder %s23, 0
      %p168 = por %p166, %p167
      %p169 = scmp.ne.s32.totalorder %s158, %s161
      %p170 = scmp.eq.s32.totalorder %s28, 1
      %p171 = por %p169, %p170
      %p172 = scmp.ne.s32.totalorder %s161, %s162
      %p173 = scmp.eq.s32.totalorder %s28, 0
      %p174 = por %p172, %p173
      %p175 = scmp.ne.s32.totalorder %s161, %s162
      %p176 = scmp.eq.s32.totalorder %s29, 1
      %p177 = por %p175, %p176
      %p179 = scmp.ne.s32.totalorder %s162, %s178
      %p180 = scmp.eq.s32.totalorder %s29, 0
      %p181 = por %p179, %p180
      %s182 = ssub.s32 %s23, %s30
      %p183 = scmp.eq.s32.totalorder %s182, 0
      %s185 = sadd.s32 %s184, 1
      %s186 = scalar_select %p183, %s184, %s185
      %p189 = pneg %p183
      %p190 = scmp.eq.s32.totalorder %s23, 1
      %p191 = por %p189, %p190
      %p192 = scmp.ne.s32.totalorder %s184, %s187
      %p193 = scmp.eq.s32.totalorder %s23, 0
      %p194 = por %p192, %p193
      %p195 = scmp.ne.s32.totalorder %s184, %s187
      %p196 = scmp.eq.s32.totalorder %s28, 1
      %p197 = por %p195, %p196
      %p198 = scmp.ne.s32.totalorder %s187, %s188
      %p199 = scmp.eq.s32.totalorder %s28, 0
      %p200 = por %p198, %p199
      %p201 = scmp.ne.s32.totalorder %s187, %s188
      %p202 = scmp.eq.s32.totalorder %s29, 1
      %p203 = por %p201, %p202
      %p205 = scmp.ne.s32.totalorder %s188, %s204
      %p206 = scmp.eq.s32.totalorder %s29, 0
      %p207 = por %p205, %p206
      %s209 = sadd.s32 %s208, 1
      %p212 = scmp.eq.s32.totalorder %s23, 1
      %p213 = scmp.ne.s32.totalorder %s208, %s210
      %p214 = scmp.eq.s32.totalorder %s23, 0
      %p215 = por %p213, %p214
      %p216 = scmp.ne.s32.totalorder %s208, %s210
      %p217 = scmp.eq.s32.totalorder %s28, 1
      %p218 = por %p216, %p217
      %p219 = scmp.ne.s32.totalorder %s210, %s211
      %p220 = scmp.eq.s32.totalorder %s28, 0
      %p221 = por %p219, %p220
      %p222 = scmp.ne.s32.totalorder %s210, %s211
      %p223 = scmp.eq.s32.totalorder %s29, 1
      %p224 = por %p222, %p223
      %p226 = scmp.ne.s32.totalorder %s211, %s225
      %p227 = scmp.eq.s32.totalorder %s29, 0
      %p228 = por %p226, %p227
      %s230 = sadd.s32 %s229, 1
      %p233 = scmp.eq.s32.totalorder %s23, 1
      %p234 = scmp.ne.s32.totalorder %s229, %s231
      %p235 = scmp.eq.s32.totalorder %s23, 0
      %p236 = por %p234, %p235
      %p237 = scmp.ne.s32.totalorder %s229, %s231
      %p238 = scmp.eq.s32.totalorder %s28, 1
      %p239 = por %p237, %p238
      %p240 = scmp.ne.s32.totalorder %s231, %s232
      %p241 = scmp.eq.s32.totalorder %s28, 0
      %p242 = por %p240, %p241
      %p243 = scmp.ne.s32.totalorder %s231, %s232
      %p244 = scmp.eq.s32.totalorder %s29, 1
      %p245 = por %p243, %p244
      %p247 = scmp.ne.s32.totalorder %s232, %s246
      %p248 = scmp.eq.s32.totalorder %s29, 0
      %p249 = por %p247, %p248
      %s251 = sadd.s32 %s250, 1
      %p254 = scmp.eq.s32.totalorder %s23, 1
      %p255 = scmp.ne.s32.totalorder %s250, %s252
      %p256 = scmp.eq.s32.totalorder %s23, 0
      %p257 = por %p255, %p256
      %p258 = scmp.ne.s32.totalorder %s250, %s252
      %p259 = scmp.eq.s32.totalorder %s28, 1
      %p260 = por %p258, %p259
      %p261 = scmp.ne.s32.totalorder %s252, %s253
      %p262 = scmp.eq.s32.totalorder %s28, 0
      %p263 = por %p261, %p262
      %p264 = scmp.ne.s32.totalorder %s252, %s253
      %p265 = scmp.eq.s32.totalorder %s29, 1
      %p266 = por %p264, %p265
      %p268 = scmp.ne.s32.totalorder %s253, %s267
      %p269 = scmp.eq.s32.totalorder %s29, 0
      %p270 = por %p268, %p269
      %s272 = sadd.s32 %s271, 1
      %p275 = scmp.eq.s32.totalorder %s23, 1
      %p276 = scmp.ne.s32.totalorder %s271, %s273
      %p277 = scmp.eq.s32.totalorder %s23, 0
      %p278 = por %p276, %p277
      %p279 = scmp.ne.s32.totalorder %s271, %s273
      %p280 = scmp.eq.s32.totalorder %s28, 1
      %p281 = por %p279, %p280
      %p282 = scmp.ne.s32.totalorder %s273, %s274
      %p283 = scmp.eq.s32.totalorder %s28, 0
      %p284 = por %p282, %p283
      %p285 = scmp.ne.s32.totalorder %s273, %s274
      %p286 = scmp.eq.s32.totalorder %s29, 1
      %p287 = por %p285, %p286
      %p289 = scmp.ne.s32.totalorder %s274, %s288
      %p290 = scmp.eq.s32.totalorder %s29, 0
      %p291 = por %p289, %p290
      %p292 = scmp.le.s32.totalorder 1, %s23
      %p293 = scmp.lt.s32.totalorder %s23, 3
      %p294 = pnand %p292, %p293
      %p295 = pneg %p294
      // Predicated region
      $region9: #{tpu_custom_call.1} parent=5 // pred_check
        _
      $region10: #{tpu_custom_call.1} parent=5 // pred_check_branch
        %297 = sbr.rel (%p294) target = $region12
      $region11: #{tpu_custom_call.1} parent=5 // pred_region
        %s298 = ssub.s32 %s23, 1
        // Predicated region
        $region13: #{tpu_custom_call.1} parent=11 // pred_check
          %p299 = pneg %p44
        $region14: #{tpu_custom_call.1} parent=11 // pred_check_branch
          %301 = sbr.rel (%p299) target = $region16
        $region15: #{tpu_custom_call.1} parent=11 // pred_region
          %303 = vsyncadd [#allocation4], 0
          %s304 = sshll.u32 %s0, 4
          %s305 = int_to_ptr.hbm [resolvable:$true] %s304
          %s306 = sshll.u32 [#allocation3], 4
          %s307 = int_to_ptr.vmem [resolvable:$true] %s306
          %312 = dma.hbm_to_vmem [thread:$0]  %s305, 256, %s307, [#allocation4], 128, 128, 8
        $region16: #{tpu_custom_call.1} parent=11 // pred_fallthru
          _
        // Predicated region
        $region17: #{tpu_custom_call.1} parent=11 // pred_check
          %p313 = pneg %p221
        $region18: #{tpu_custom_call.1} parent=11 // pred_check_branch
          %315 = sbr.rel (%p313) target = $region20
        $region19: #{tpu_custom_call.1} parent=11 // pred_region
          %317 = vsyncadd [#allocation10], 0
          %s318 = sshll.u32 %s7, 4
          %s319 = int_to_ptr.hbm [resolvable:$true] %s318
          %s320 = sshll.u32 [#allocation9], 4
          %s321 = int_to_ptr.vmem [resolvable:$true] %s320
          %326 = dma.hbm_to_vmem [thread:$0]  %s319, 256, %s321, [#allocation10], 128, 128, 8
        $region20: #{tpu_custom_call.1} parent=11 // pred_fallthru
          _
        // Predicated region
        $region21: #{tpu_custom_call.1} parent=11 // pred_check
          %p327 = pneg %p242
        $region22: #{tpu_custom_call.1} parent=11 // pred_check_branch
          %329 = sbr.rel (%p327) target = $region24
        $region23: #{tpu_custom_call.1} parent=11 // pred_region
          %331 = vsyncadd [#allocation10], 0
          %s332 = sshll.u32 %s8, 4
          %s333 = int_to_ptr.hbm [resolvable:$true] %s332
          %s334 = sshll.u32 [#allocation11], 4
          %s335 = int_to_ptr.vmem [resolvable:$true] %s334
          %340 = dma.hbm_to_vmem [thread:$0]  %s333, 256, %s335, [#allocation10], 128, 128, 8
        $region24: #{tpu_custom_call.1} parent=11 // pred_fallthru
          _
        // Predicated region
        $region25: #{tpu_custom_call.1} parent=11 // pred_check
          %p341 = pneg %p263
        $region26: #{tpu_custom_call.1} parent=11 // pred_check_branch
          %343 = sbr.rel (%p341) target = $region28
        $region27: #{tpu_custom_call.1} parent=11 // pred_region
          %345 = vsyncadd [#allocation13], 0
          %s346 = sshll.u32 %s9, 4
          %s347 = int_to_ptr.hbm [resolvable:$true] %s346
          %s348 = sshll.u32 [#allocation12], 4
          %s349 = int_to_ptr.vmem [resolvable:$true] %s348
          %354 = dma.hbm_to_vmem [thread:$0]  %s347, 256, %s349, [#allocation13], 128, 128, 8
        $region28: #{tpu_custom_call.1} parent=11 // pred_fallthru
          _
      $region12: #{tpu_custom_call.1} parent=5 // pred_fallthru
        _
      %p355 = scmp.lt.s32.totalorder %s23, 2
      // Predicated region
      $region29: #{tpu_custom_call.1} parent=5 // pred_check
        %p356 = pneg %p355
      $region30: #{tpu_custom_call.1} parent=5 // pred_check_branch
        %358 = sbr.rel (%p356) target = $region32
      $region31: #{tpu_custom_call.1} parent=5 // pred_region
        // Predicated region
        $region33: #{tpu_custom_call.1} parent=31 // pred_check
          %p359 = pneg %p64
        $region34: #{tpu_custom_call.1} parent=31 // pred_check_branch
          %361 = sbr.rel (%p359) target = $region36
        $region35: #{tpu_custom_call.1} parent=31 // pred_region
          %s362 = sand.u32 %s23, 1
          %s363 = scalar_lea.sflag [#allocation7], %s362
          %s364 = sand.u32 %s54, 1
          %s365 = scalar_lea.vmem [#allocation6], %s364
          %367 = vsyncadd %s363, 0
          %s368 = scalar_lea.hbm %s1, %s23
          %s370 = sshll.u32 %s368, 4
          %s371 = int_to_ptr.hbm [resolvable:$true] %s370
          %s372 = sshll.u32 %s365, 4
          %s373 = int_to_ptr.vmem [resolvable:$true] %s372
          %375 = dma.hbm_to_vmem [thread:$0]  %s371, 16, %s373, %s363
        $region36: #{tpu_custom_call.1} parent=31 // pred_fallthru
          _
        // Predicated region
        $region37: #{tpu_custom_call.1} parent=31 // pred_check
          %p376 = pneg %p90
        $region38: #{tpu_custom_call.1} parent=31 // pred_check_branch
          %378 = sbr.rel (%p376) target = $region40
        $region39: #{tpu_custom_call.1} parent=31 // pred_region
          %p379 = scmp.lt.s32.totalorder %s23, 1
          %s380 = scalar_select %p379, %s23, 1
          %s381 = smul.addr %s380, 16
          %s382 = smul.addr %s381, 4
          %s383 = scalar_lea.vmem %s2, %s382
        $region40: #{tpu_custom_call.1} parent=31 // pred_fallthru
          _
        // Predicated region
        $region41: #{tpu_custom_call.1} parent=31 // pred_check
          %p384 = pneg %p116
        $region42: #{tpu_custom_call.1} parent=31 // pred_check_branch
          %386 = sbr.rel (%p384) target = $region44
        $region43: #{tpu_custom_call.1} parent=31 // pred_region
          %p387 = scmp.lt.s32.totalorder %s23, 1
          %s388 = scalar_select %p387, %s23, 1
          %s389 = smul.addr %s388, 8
          %s390 = smul.addr %s389, 4
          %s391 = scalar_lea.vmem %s3, %s390
        $region44: #{tpu_custom_call.1} parent=31 // pred_fallthru
          _
        // Predicated region
        $region45: #{tpu_custom_call.1} parent=31 // pred_check
          %p392 = pneg %p142
        $region46: #{tpu_custom_call.1} parent=31 // pred_check_branch
          %394 = sbr.rel (%p392) target = $region48
        $region47: #{tpu_custom_call.1} parent=31 // pred_region
          %p395 = scmp.lt.s32.totalorder %s23, 1
          %s396 = scalar_select %p395, %s23, 1
          %s397 = scalar_lea.vmem %s4, %s396
        $region48: #{tpu_custom_call.1} parent=31 // pred_fallthru
          _
        // Predicated region
        $region49: #{tpu_custom_call.1} parent=31 // pred_check
          %p398 = pneg %p168
        $region50: #{tpu_custom_call.1} parent=31 // pred_check_branch
          %400 = sbr.rel (%p398) target = $region52
        $region51: #{tpu_custom_call.1} parent=31 // pred_region
          %s401 = sand.u32 %s23, 1
          %s402 = scalar_lea.sflag [#allocation7], %s401
          %s403 = sand.u32 %s158, 1
          %s404 = smul.addr %s403, 64
          %s405 = scalar_lea.vmem [#allocation8], %s404
          %407 = vsyncadd %s402, 0
          %s408 = smul.addr %s23, 16
          %s409 = smul.addr %s408, 4
          %s410 = scalar_lea.hbm %s5, %s409
          %s411 = sshll.u32 %s410, 4
          %s412 = int_to_ptr.hbm [resolvable:$true] %s411
          %s413 = sshll.u32 %s405, 4
          %s414 = int_to_ptr.vmem [resolvable:$true] %s413
          %419 = dma.hbm_to_vmem [thread:$0]  %s412, 1024, %s414, %s402, 128, 128, 8
        $region52: #{tpu_custom_call.1} parent=31 // pred_fallthru
          _
        // Predicated region
        $region53: #{tpu_custom_call.1} parent=31 // pred_check
          %p420 = pneg %p194
        $region54: #{tpu_custom_call.1} parent=31 // pred_check_branch
          %422 = sbr.rel (%p420) target = $region56
        $region55: #{tpu_custom_call.1} parent=31 // pred_region
          %p423 = scmp.lt.s32.totalorder %s23, 1
          %s424 = scalar_select %p423, %s23, 1
          %s425 = smul.addr %s424, 16
          %s426 = smul.addr %s425, 4
          %s427 = scalar_lea.vmem %s6, %s426
        $region56: #{tpu_custom_call.1} parent=31 // pred_fallthru
          _
      $region32: #{tpu_custom_call.1} parent=5 // pred_fallthru
        _
      %p428 = scmp.le.s32.totalorder 1, %s23
      %p429 = scmp.lt.s32.totalorder %s23, 3
      %p430 = pnand %p428, %p429
      %p431 = pneg %p430
      // Predicated region
      $region57: #{tpu_custom_call.1} parent=5 // pred_check
        _
      $region58: #{tpu_custom_call.1} parent=5 // pred_check_branch
        %433 = sbr.rel (%p430) target = $region60
      $region59: #{tpu_custom_call.1} parent=5 // pred_region
        %s434 = ssub.s32 %s23, 1
        // Predicated region
        $region61: #{tpu_custom_call.1} parent=59 // pred_check
          %p435 = pneg %p44
        $region62: #{tpu_custom_call.1} parent=59 // pred_check_branch
          %437 = sbr.rel (%p435) target = $region64
        $region63: #{tpu_custom_call.1} parent=59 // pred_region
          %439 = dma.done [#allocation4], 256
        $region64: #{tpu_custom_call.1} parent=59 // pred_fallthru
          _
        %s440 = sand.u32 %s28, 1
        %s441 = scalar_lea.sflag [#allocation7], %s440
        %s442 = sand.u32 %s57, 1
        %s443 = scalar_lea.vmem [#allocation6], %s442
        // Predicated region
        $region65: #{tpu_custom_call.1} parent=59 // pred_check
          %p444 = pneg %p70
        $region66: #{tpu_custom_call.1} parent=59 // pred_check_branch
          %446 = sbr.rel (%p444) target = $region68
        $region67: #{tpu_custom_call.1} parent=59 // pred_region
          %448 = dma.done %s441, 16
        $region68: #{tpu_custom_call.1} parent=59 // pred_fallthru
          _
        %s449 = sand.u32 %s28, 1
        %s450 = scalar_lea.sflag [#allocation7], %s449
        %s451 = sand.u32 %s161, 1
        %s452 = smul.addr %s451, 64
        %s453 = scalar_lea.vmem [#allocation8], %s452
        // Predicated region
        $region69: #{tpu_custom_call.1} parent=59 // pred_check
          %p454 = pneg %p174
        $region70: #{tpu_custom_call.1} parent=59 // pred_check_branch
          %456 = sbr.rel (%p454) target = $region72
        $region71: #{tpu_custom_call.1} parent=59 // pred_region
          %458 = dma.done %s450, 1024
        $region72: #{tpu_custom_call.1} parent=59 // pred_fallthru
          _
        // Predicated region
        $region73: #{tpu_custom_call.1} parent=59 // pred_check
          %p459 = pneg %p221
        $region74: #{tpu_custom_call.1} parent=59 // pred_check_branch
          %461 = sbr.rel (%p459) target = $region76
        $region75: #{tpu_custom_call.1} parent=59 // pred_region
          %463 = dma.done [#allocation10], 256
        $region76: #{tpu_custom_call.1} parent=59 // pred_fallthru
          _
        // Predicated region
        $region77: #{tpu_custom_call.1} parent=59 // pred_check
          %p464 = pneg %p242
        $region78: #{tpu_custom_call.1} parent=59 // pred_check_branch
          %466 = sbr.rel (%p464) target = $region80
        $region79: #{tpu_custom_call.1} parent=59 // pred_region
          %468 = dma.done [#allocation10], 256
        $region80: #{tpu_custom_call.1} parent=59 // pred_fallthru
          _
        // Predicated region
        $region81: #{tpu_custom_call.1} parent=59 // pred_check
          %p469 = pneg %p263
        $region82: #{tpu_custom_call.1} parent=59 // pred_check_branch
          %471 = sbr.rel (%p469) target = $region84
        $region83: #{tpu_custom_call.1} parent=59 // pred_region
          %473 = dma.done [#allocation13], 256
        $region84: #{tpu_custom_call.1} parent=59 // pred_fallthru
          _
        %p474 = pneg %p44
        %p475 = pneg %p41
        %s476 = sand.u32 %s28, 1
        %s477 = scalar_lea.sflag [#allocation7], %s476
        %s478 = sand.u32 %s57, 1
        %s479 = scalar_lea.vmem [#allocation6], %s478
        %p480 = pneg %p70
        %p481 = pneg %p67
        %p482 = scmp.lt.s32.totalorder %s28, 1
        %s483 = scalar_select %p482, %s28, 1
        %s484 = smul.addr %s483, 16
        %s485 = smul.addr %s484, 4
        %s486 = scalar_lea.vmem %s2, %s485
        %p487 = pneg %p96
        %p488 = pneg %p93
        %p489 = scmp.lt.s32.totalorder %s28, 1
        %s490 = scalar_select %p489, %s28, 1
        %s491 = smul.addr %s490, 8
        %s492 = smul.addr %s491, 4
        %s493 = scalar_lea.vmem %s3, %s492
        %p494 = pneg %p122
        %p495 = pneg %p119
        %p496 = scmp.lt.s32.totalorder %s28, 1
        %s497 = scalar_select %p496, %s28, 1
        %s498 = scalar_lea.vmem %s4, %s497
        %p499 = pneg %p148
        %p500 = pneg %p145
        %s501 = sand.u32 %s28, 1
        %s502 = scalar_lea.sflag [#allocation7], %s501
        %s503 = sand.u32 %s161, 1
        %s504 = smul.addr %s503, 64
        %s505 = scalar_lea.vmem [#allocation8], %s504
        %p506 = pneg %p174
        %p507 = pneg %p171
        %p508 = scmp.lt.s32.totalorder %s28, 1
        %s509 = scalar_select %p508, %s28, 1
        %s510 = smul.addr %s509, 16
        %s511 = smul.addr %s510, 4
        %s512 = scalar_lea.vmem %s6, %s511
        %p513 = pneg %p200
        %p514 = pneg %p197
        %p515 = pneg %p221
        %p516 = pneg %p218
        %p517 = pneg %p242
        %p518 = pneg %p239
        %p519 = pneg %p263
        %p520 = pneg %p260
        %p521 = pneg %p284
        %p522 = pneg %p281
        %p523 = scmp.lt.s32.totalorder %s28, 1
        %s524 = scalar_select %p523, %s28, 1
        %s525 = smul.addr %s524, 16
        %s526 = smul.addr %s525, 4
        %s527 = scalar_lea.vmem %s2, %s526
        %p528 = scmp.lt.s32.totalorder %s28, 1
        %s529 = scalar_select %p528, %s28, 1
        %s530 = smul.addr %s529, 8
        %s531 = smul.addr %s530, 4
        %s532 = scalar_lea.vmem %s3, %s531
        %p533 = scmp.lt.s32.totalorder %s28, 1
        %s534 = scalar_select %p533, %s28, 1
        %s535 = scalar_lea.vmem %s4, %s534
        %p536 = scmp.lt.s32.totalorder %s28, 1
        %s537 = scalar_select %p536, %s28, 1
        %s538 = smul.addr %s537, 16
        %s539 = smul.addr %s538, 4
        %s540 = scalar_lea.vmem %s6, %s539
        %p542 = scmp.eq.s32.totalorder %s28, 0
        // Predicated region
        $region85: #{tpu_custom_call.1} parent=59 // pred_check
          %p543 = pneg %p542
        $region86: #{tpu_custom_call.1} parent=59 // pred_check_branch
          %545 = sbr.rel (%p543) target = $region88
        $region87: #{tpu_custom_call.1} parent=59 // pred_region
          %v546 = vld [vmem:[#allocation3] sm:$0xff]
          %v547 = vld [vmem:[#allocation3 + $0x8] sm:$0xff]
          %vm548 = vcmask 523264
          %549 = vst.msk [vmem:[#allocation2] sm:$0xff] %vm548, %v546
          %550 = vst.msk [vmem:[#allocation2 + $0x8] sm:$0xff] %vm548, %v547
        $region88: #{tpu_custom_call.1} parent=59 // pred_fallthru
          _
        %v551 = vld [vmem:[#allocation2] sm:$0xff]
        %v552 = vld [vmem:[#allocation2 + $0x8] sm:$0xff]
        %v553 = vld [vmem:[#allocation9] sm:$0xff]
        %v554 = vld [vmem:[#allocation9 + $0x8] sm:$0xff]
        %v555 = vld [vmem:[#allocation11] sm:$0xff]
        %v556 = vld [vmem:[#allocation11 + $0x8] sm:$0xff]
        %v557 = vld [vmem:[#allocation12] sm:$0xff]
        %v558 = vld [vmem:[#allocation12 + $0x8] sm:$0xff]
        %v559 = vld [vmem:[%s443] sm:$0x1]
        %v560 = vmul.f32 %v551, %v551
        %v561 = vmul.f32 %v552, %v552
        %vm562 = vcmask 523264
        %v563 = vsel %vm562, %v560, 0.0
        %564 = vadd.xlane.f32.xlu0 %v563
        %v565 = vpop.xlane.xlu0 %564
        %v566 = vsel %vm562, %v561, 0.0
        %567 = vadd.xlane.f32.xlu0 %v566
        %v568 = vpop.xlane.xlu0 %567
        %v569 = vrcp.pop 64.0
        %v570 = vmul.f32 64.0, %v569
        %v571 = vsub.f32 1.0, %v570
        %v572 = vmul.f32 %v569, %v571
        %v573 = vadd.f32 %v569, %v572
        %vm574 = vweird.f32 %v569
        %v575 = vsel %vm574, %v569, %v573
        %v576 = vmul.f32 %v565, %v575
        %v577 = vmul.f32 %v568, %v575
        %v578 = vadd.f32 %v576, 1e-06
        %v579 = vadd.f32 %v577, 1e-06
        %v580 = vrsqrt.pop %v578
        %v581 = vmul.f32 %v580, %v578
        %v582 = vmul.f32 %v581, %v580
        %v583 = vmul.f32 0.5, %v582
        %v584 = vsub.f32 1.5, %v583
        %v585 = vmul.f32 %v580, %v584
        %vm586 = vweird.f32 %v578
        %vm587 = vweird.f32 %v580
        %vm588 = vmor %vm586, %vm587
        %v589 = vsel %vm588, %v580, %v585
        %v590 = vrsqrt.pop %v579
        %v591 = vmul.f32 %v590, %v579
        %v592 = vmul.f32 %v591, %v590
        %v593 = vmul.f32 0.5, %v592
        %v594 = vsub.f32 1.5, %v593
        %v595 = vmul.f32 %v590, %v594
        %vm596 = vweird.f32 %v579
        %vm597 = vweird.f32 %v590
        %vm598 = vmor %vm596, %vm597
        %v599 = vsel %vm598, %v590, %v595
        %v600 = vmul.f32 %v551, %v589
        %v601 = vmul.f32 %v552, %v599
        %v603 = vperm.slane %v559, 0
        %v605 = vmul.f32 %v603, %v600
        %v606 = vmul.f32 %v603, %v601
        %v607 = vpack.c.bf16 %v606, %v605
        %v608 = vld [vmem:[%s527] sm:$0xff]
        %v609 = vld [vmem:[%s527 + $0x8] sm:$0xff]
        %v610 = vld [vmem:[%s527 + $0x10] sm:$0xff]
        %v611 = vld [vmem:[%s527 + $0x18] sm:$0xff]
        %v612 = vld [vmem:[%s527 + $0x20] sm:$0xff]
        %v613 = vld [vmem:[%s527 + $0x28] sm:$0xff]
        %v614 = vld [vmem:[%s527 + $0x30] sm:$0xff]
        %v615 = vld [vmem:[%s527 + $0x38] sm:$0xff]
        %v624 = vunpack.c.l.b16 %v608
        %v625 = vunpack.c.h.b16 %v608
        %v626 = vunpack.c.l.b16 %v609
        %v627 = vunpack.c.h.b16 %v609
        %v628 = vunpack.c.l.b16 %v610
        %v629 = vunpack.c.h.b16 %v610
        %v630 = vunpack.c.l.b16 %v611
        %v631 = vunpack.c.h.b16 %v611
        %v632 = vunpack.c.l.b16 %v612
        %v633 = vunpack.c.h.b16 %v612
        %v634 = vunpack.c.l.b16 %v613
        %v635 = vunpack.c.h.b16 %v613
        %v636 = vunpack.c.l.b16 %v614
        %v637 = vunpack.c.h.b16 %v614
        %v638 = vunpack.c.l.b16 %v615
        %v639 = vunpack.c.h.b16 %v615
        %v640 = vpack.c.b16 %v626, %v624
        %v641 = vpack.c.b16 %v627, %v625
        %v642 = vpack.c.b16 %v630, %v628
        %v643 = vpack.c.b16 %v631, %v629
        %v644 = vpack.c.b16 %v634, %v632
        %v645 = vpack.c.b16 %v635, %v633
        %v646 = vpack.c.b16 %v638, %v636
        %v647 = vpack.c.b16 %v639, %v637
        %v657 = vsel %vm562, %v607, 0
        %659 = vmatpush.bf16.msra.mxu0 0
        %660 = vmatpush.bf16.msra.mxu0 0
        %661 = vmatpush.bf16.msra.mxu0 0
        %662 = vmatpush.bf16.msra.mxu0 0
        %663 = vmatpush.bf16.msra.mxu0 %v646
        %664 = vmatpush.bf16.msra.mxu0 %v644
        %665 = vmatpush.bf16.msra.mxu0 %v642
        %666 = vmatpush.bf16.msra.mxu0 %v640
        %667 = vmatmul.bf16.gmra.mxu0 %v657
        %v668 = vpop.f32.mrf.mxu0
        %v669 = vadd.f32 0.0, %v668
        %v670 = vpop.f32.mrf.mxu0
        %v671 = vadd.f32 0.0, %v670
        %672 = vdwg.mxu0
        %673 = vmatpush.bf16.msra.mxu0 0
        %674 = vmatpush.bf16.msra.mxu0 0
        %675 = vmatpush.bf16.msra.mxu0 0
        %676 = vmatpush.bf16.msra.mxu0 0
        %677 = vmatpush.bf16.msra.mxu0 %v647
        %678 = vmatpush.bf16.msra.mxu0 %v645
        %679 = vmatpush.bf16.msra.mxu0 %v643
        %680 = vmatpush.bf16.msra.mxu0 %v641
        %681 = vmatmul.bf16.gmra.mxu0 %v657
        %v682 = vpop.f32.mrf.mxu0
        %v683 = vadd.f32 0.0, %v682
        %v684 = vpop.f32.mrf.mxu0
        %v685 = vadd.f32 0.0, %v684
        %686 = vdwg.mxu0
        %v687 = vmul.f32 %v669, %v553
        %v688 = vmul.f32 %v671, %v554
        %691 = vrot.lane.b32.xlu0 %v669, 112
        %v692 = vpop.permute.xlu0 %691
        %693 = vrot.lane.b32.xlu0 %v671, 112
        %v694 = vpop.permute.xlu0 %693
        %697 = vrot.lane.b32.xlu0 %v669, 16
        %v698 = vpop.permute.xlu0 %697
        %699 = vrot.lane.b32.xlu0 %v671, 16
        %v700 = vpop.permute.xlu0 %699
        %vm703 = vcmask 130048
        %v704 = vsel %vm703, %v692, %v698
        %v705 = vsel %vm703, %v694, %v700
        %vm706 = vcmask 261120
        %v707 = vsel %vm706, %v704, %v692
        %v708 = vsel %vm706, %v705, %v694
        %vm709 = vcmask 392192
        %v710 = vsel %vm709, %v707, %v698
        %v711 = vsel %vm709, %v708, %v700
        %v712 = vmul.f32 %v710, %v555
        %v713 = vmul.f32 %v711, %v556
        %v714 = vadd.f32 %v687, %v712
        %v715 = vadd.f32 %v688, %v713
        %718 = vrot.lane.b32.xlu0 %v553, 64
        %v719 = vpop.permute.xlu0 %718
        %720 = vrot.lane.b32.xlu0 %v554, 64
        %v721 = vpop.permute.xlu0 %720
        %v724 = vmul.f32 %v669, %v719
        %v725 = vmul.f32 %v671, %v721
        %726 = vrot.lane.b32.xlu0 %v669, 48
        %v727 = vpop.permute.xlu0 %726
        %728 = vrot.lane.b32.xlu0 %v671, 48
        %v729 = vpop.permute.xlu0 %728
        %732 = vrot.lane.b32.xlu0 %v669, 80
        %v733 = vpop.permute.xlu0 %732
        %734 = vrot.lane.b32.xlu0 %v671, 80
        %v735 = vpop.permute.xlu0 %734
        %v738 = vsel %vm703, %v727, %v733
        %v739 = vsel %vm703, %v729, %v735
        %v740 = vsel %vm706, %v738, %v727
        %v741 = vsel %vm706, %v739, %v729
        %v742 = vsel %vm709, %v740, %v733
        %v743 = vsel %vm709, %v741, %v735
        %v744 = vmul.f32 %v742, %v555
        %v745 = vmul.f32 %v743, %v556
        %748 = vrot.lane.b32.xlu0 %v744, 64
        %v749 = vpop.permute.xlu0 %748
        %750 = vrot.lane.b32.xlu0 %v745, 64
        %v751 = vpop.permute.xlu0 %750
        %v754 = vadd.f32 %v724, %v749
        %v755 = vadd.f32 %v725, %v751
        %v756 = vpack.c.bf16 %v714, %v714
        %v757 = vpack.c.bf16 %v715, %v715
        %v758 = vpack.c.bf16 %v754, %v754
        %v759 = vpack.c.bf16 %v755, %v755
        %v760 = vpack.c.bf16 %v683, %v683
        %v761 = vpack.c.bf16 %v685, %v685
        %v764 = vunpack.c.l.b16 %v756
        %v765 = vunpack.c.l.b16 %v757
        %v766 = vpack.c.b16 %v765, %v764
        %v769 = vunpack.c.l.b16 %v758
        %v770 = vunpack.c.l.b16 %v759
        %v771 = vpack.c.b16 %v770, %v769
        %772 = vrot.lane.b32.xlu0 %v771, 64
        %v773 = vpop.permute.xlu0 %772
        %v775 = vsel %vm706, %v766, 0
        %v778 = vsel %vm706, %v773, 0
        %780 = vmatpush.bf16.xpose.msra.mxu0 0
        %781 = vmatpush.bf16.xpose.msra.mxu0 0
        %782 = vmatpush.bf16.xpose.msra.mxu0 0
        %783 = vmatpush.bf16.xpose.msra.mxu0 0
        %784 = vmatpush.bf16.xpose.msra.mxu0 0
        %785 = vmatpush.bf16.xpose.msra.mxu0 0
        %786 = vmatpush.bf16.xpose.msra.mxu0 0
        %787 = vmatpush.bf16.xpose.msra.mxu0 %v778
        %788 = vmatmul.bf16.gmra.mxu0 %v775
        %v789 = vpop.f32.mrf.mxu0
        %v790 = vadd.f32 %v557, %v789
        %v791 = vpop.f32.mrf.mxu0
        %v792 = vadd.f32 %v558, %v791
        %793 = vdwg.mxu0
        %v794 = vsel %vm703, %v790, -inf
        %795 = vmax.xlane.f32.xlu0 %v794
        %v796 = vpop.xlane.xlu0 %795
        %v797 = vsel %vm703, %v792, -inf
        %798 = vmax.xlane.f32.xlu0 %v797
        %v799 = vpop.xlane.xlu0 %798
        %v800 = vsub.f32 %v790, %v796
        %v801 = vsub.f32 %v792, %v799
        %v802 = vmul.f32 %v800, 1.442695
        %v803 = vpow.pop %v802
        %v804 = vmul.f32 %v801, 1.442695
        %v805 = vpow.pop %v804
        %v806 = vsel %vm703, %v803, 0.0
        %807 = vadd.xlane.f32.xlu0 %v806
        %v808 = vpop.xlane.xlu0 %807
        %v809 = vsel %vm703, %v805, 0.0
        %810 = vadd.xlane.f32.xlu0 %v809
        %v811 = vpop.xlane.xlu0 %810
        %v812 = vrcp.pop %v808
        %v813 = vrcp.pop %v811
        %v814 = vmul.f32 %v803, %v812
        %v815 = vmul.f32 %v805, %v813
        %v816 = vpack.c.bf16 %v815, %v814
        %v819 = vunpack.c.l.b16 %v760
        %v820 = vunpack.c.l.b16 %v761
        %v821 = vpack.c.b16 %v820, %v819
        %v824 = vsel %vm703, %v816, 0
        %826 = vmatpush.bf16.msra.mxu0 0
        %827 = vmatpush.bf16.msra.mxu0 0
        %828 = vmatpush.bf16.msra.mxu0 0
        %829 = vmatpush.bf16.msra.mxu0 0
        %830 = vmatpush.bf16.msra.mxu0 0
        %831 = vmatpush.bf16.msra.mxu0 0
        %832 = vmatpush.bf16.msra.mxu0 0
        %833 = vmatpush.bf16.msra.mxu0 %v821
        %834 = vmatmul.bf16.gmra.mxu0 %v824
        %v835 = vpop.f32.mrf.mxu0
        %v836 = vadd.f32 0.0, %v835
        %v837 = vpop.f32.mrf.mxu0
        %v838 = vadd.f32 0.0, %v837
        %839 = vdwg.mxu0
        %840 = vrot.lane.b32.xlu0 %v766, 96
        %v841 = vpop.permute.xlu0 %840
        %842 = vrot.lane.b32.xlu0 %v771, 32
        %v843 = vpop.permute.xlu0 %842
        %v845 = vsel %vm706, %v841, 0
        %v848 = vsel %vm706, %v843, 0
        %850 = vmatpush.bf16.xpose.msra.mxu0 0
        %851 = vmatpush.bf16.xpose.msra.mxu0 0
        %852 = vmatpush.bf16.xpose.msra.mxu0 0
        %853 = vmatpush.bf16.xpose.msra.mxu0 0
        %854 = vmatpush.bf16.xpose.msra.mxu0 0
        %855 = vmatpush.bf16.xpose.msra.mxu0 0
        %856 = vmatpush.bf16.xpose.msra.mxu0 0
        %857 = vmatpush.bf16.xpose.msra.mxu0 %v848
        %858 = vmatmul.bf16.gmra.mxu0 %v845
        %v859 = vpop.f32.mrf.mxu0
        %v860 = vadd.f32 %v557, %v859
        %v861 = vpop.f32.mrf.mxu0
        %v862 = vadd.f32 %v558, %v861
        %863 = vdwg.mxu0
        %v864 = vsel %vm703, %v860, -inf
        %865 = vmax.xlane.f32.xlu0 %v864
        %v866 = vpop.xlane.xlu0 %865
        %v867 = vsel %vm703, %v862, -inf
        %868 = vmax.xlane.f32.xlu0 %v867
        %v869 = vpop.xlane.xlu0 %868
        %v870 = vsub.f32 %v860, %v866
        %v871 = vsub.f32 %v862, %v869
        %v872 = vmul.f32 %v870, 1.442695
        %v873 = vpow.pop %v872
        %v874 = vmul.f32 %v871, 1.442695
        %v875 = vpow.pop %v874
        %v876 = vsel %vm703, %v873, 0.0
        %877 = vadd.xlane.f32.xlu0 %v876
        %v878 = vpop.xlane.xlu0 %877
        %v879 = vsel %vm703, %v875, 0.0
        %880 = vadd.xlane.f32.xlu0 %v879
        %v881 = vpop.xlane.xlu0 %880
        %v882 = vrcp.pop %v878
        %v883 = vrcp.pop %v881
        %v884 = vmul.f32 %v873, %v882
        %v885 = vmul.f32 %v875, %v883
        %v886 = vpack.c.bf16 %v885, %v884
        %887 = vrot.lane.b32.xlu0 %v821, 96
        %v888 = vpop.permute.xlu0 %887
        %v891 = vsel %vm703, %v886, 0
        %893 = vmatpush.bf16.msra.mxu0 0
        %894 = vmatpush.bf16.msra.mxu0 0
        %895 = vmatpush.bf16.msra.mxu0 0
        %896 = vmatpush.bf16.msra.mxu0 0
        %897 = vmatpush.bf16.msra.mxu0 0
        %898 = vmatpush.bf16.msra.mxu0 0
        %899 = vmatpush.bf16.msra.mxu0 0
        %900 = vmatpush.bf16.msra.mxu0 %v888
        %901 = vmatmul.bf16.gmra.mxu0 %v891
        %v902 = vpop.f32.mrf.mxu0
        %v903 = vadd.f32 0.0, %v902
        %v904 = vpop.f32.mrf.mxu0
        %v905 = vadd.f32 0.0, %v904
        %906 = vdwg.mxu0
        %909 = vrot.lane.b32.xlu0 %v903, 32
        %v910 = vpop.permute.xlu0 %909
        %911 = vrot.lane.b32.xlu0 %v905, 32
        %v912 = vpop.permute.xlu0 %911
        %v915 = vsel %vm706, %v836, %v910
        %v916 = vsel %vm706, %v838, %v912
        %v917 = vpack.c.bf16 %v916, %v915
        %v918 = vld [vmem:[%s532] sm:$0xf]
        %v919 = vld [vmem:[%s532 + $0x4] sm:$0xf]
        %v920 = vld [vmem:[%s532 + $0x8] sm:$0xf]
        %v921 = vld [vmem:[%s532 + $0xc] sm:$0xf]
        %v922 = vld [vmem:[%s532 + $0x10] sm:$0xf]
        %v923 = vld [vmem:[%s532 + $0x14] sm:$0xf]
        %v924 = vld [vmem:[%s532 + $0x18] sm:$0xf]
        %v925 = vld [vmem:[%s532 + $0x1c] sm:$0xf]
        %v934 = vunpack.c.l.b16 %v918
        %v935 = vunpack.c.l.b16 %v919
        %v936 = vunpack.c.l.b16 %v920
        %v937 = vunpack.c.l.b16 %v921
        %v938 = vunpack.c.l.b16 %v922
        %v939 = vunpack.c.l.b16 %v923
        %v940 = vunpack.c.l.b16 %v924
        %v941 = vunpack.c.l.b16 %v925
        %v942 = vpack.c.b16 %v935, %v934
        %v943 = vpack.c.b16 %v937, %v936
        %v944 = vpack.c.b16 %v939, %v938
        %v945 = vpack.c.b16 %v941, %v940
        %v951 = vsel %vm562, %v917, 0
        %953 = vmatpush.bf16.msra.mxu0 0
        %954 = vmatpush.bf16.msra.mxu0 0
        %955 = vmatpush.bf16.msra.mxu0 0
        %956 = vmatpush.bf16.msra.mxu0 0
        %957 = vmatpush.bf16.msra.mxu0 %v945
        %958 = vmatpush.bf16.msra.mxu0 %v944
        %959 = vmatpush.bf16.msra.mxu0 %v943
        %960 = vmatpush.bf16.msra.mxu0 %v942
        %961 = vmatmul.bf16.gmra.mxu0 %v951
        %v962 = vpop.f32.mrf.mxu0
        %v963 = vadd.f32 0.0, %v962
        %v964 = vpop.f32.mrf.mxu0
        %v965 = vadd.f32 0.0, %v964
        %966 = vdwg.mxu0
        %v967 = vadd.f32 %v551, %v963
        %v968 = vadd.f32 %v552, %v965
        %v969 = vld [vmem:[%s535] sm:$0x1]
        %v970 = vmul.f32 %v967, %v967
        %v971 = vmul.f32 %v968, %v968
        %v972 = vsel %vm562, %v970, 0.0
        %973 = vadd.xlane.f32.xlu0 %v972
        %v974 = vpop.xlane.xlu0 %973
        %v975 = vsel %vm562, %v971, 0.0
        %976 = vadd.xlane.f32.xlu0 %v975
        %v977 = vpop.xlane.xlu0 %976
        %v978 = vmul.f32 %v974, %v575
        %v979 = vmul.f32 %v977, %v575
        %v980 = vadd.f32 %v978, 1e-06
        %v981 = vadd.f32 %v979, 1e-06
        %v982 = vrsqrt.pop %v980
        %v983 = vmul.f32 %v982, %v980
        %v984 = vmul.f32 %v983, %v982
        %v985 = vmul.f32 0.5, %v984
        %v986 = vsub.f32 1.5, %v985
        %v987 = vmul.f32 %v982, %v986
        %vm988 = vweird.f32 %v980
        %vm989 = vweird.f32 %v982
        %vm990 = vmor %vm988, %vm989
        %v991 = vsel %vm990, %v982, %v987
        %v992 = vrsqrt.pop %v981
        %v993 = vmul.f32 %v992, %v981
        %v994 = vmul.f32 %v993, %v992
        %v995 = vmul.f32 0.5, %v994
        %v996 = vsub.f32 1.5, %v995
        %v997 = vmul.f32 %v992, %v996
        %vm998 = vweird.f32 %v981
        %vm999 = vweird.f32 %v992
        %vm1000 = vmor %vm998, %vm999
        %v1001 = vsel %vm1000, %v992, %v997
        %v1002 = vmul.f32 %v967, %v991
        %v1003 = vmul.f32 %v968, %v1001
        %v1005 = vperm.slane %v969, 0
        %v1007 = vmul.f32 %v1005, %v1002
        %v1008 = vmul.f32 %v1005, %v1003
        %v1009 = vpack.c.bf16 %v1008, %v1007
        %v1010 = vld [vmem:[%s453] sm:$0xff]
        %v1011 = vld [vmem:[%s453 + $0x8] sm:$0xff]
        %v1012 = vld [vmem:[%s453 + $0x10] sm:$0xff]
        %v1013 = vld [vmem:[%s453 + $0x18] sm:$0xff]
        %v1014 = vld [vmem:[%s453 + $0x20] sm:$0xff]
        %v1015 = vld [vmem:[%s453 + $0x28] sm:$0xff]
        %v1016 = vld [vmem:[%s453 + $0x30] sm:$0xff]
        %v1017 = vld [vmem:[%s453 + $0x38] sm:$0xff]
        %v1026 = vunpack.c.l.b16 %v1010
        %v1027 = vunpack.c.h.b16 %v1010
        %v1028 = vunpack.c.l.b16 %v1011
        %v1029 = vunpack.c.h.b16 %v1011
        %v1030 = vunpack.c.l.b16 %v1012
        %v1031 = vunpack.c.h.b16 %v1012
        %v1032 = vunpack.c.l.b16 %v1013
        %v1033 = vunpack.c.h.b16 %v1013
        %v1034 = vunpack.c.l.b16 %v1014
        %v1035 = vunpack.c.h.b16 %v1014
        %v1036 = vunpack.c.l.b16 %v1015
        %v1037 = vunpack.c.h.b16 %v1015
        %v1038 = vunpack.c.l.b16 %v1016
        %v1039 = vunpack.c.h.b16 %v1016
        %v1040 = vunpack.c.l.b16 %v1017
        %v1041 = vunpack.c.h.b16 %v1017
        %v1042 = vpack.c.b16 %v1028, %v1026
        %v1043 = vpack.c.b16 %v1029, %v1027
        %v1044 = vpack.c.b16 %v1032, %v1030
        %v1045 = vpack.c.b16 %v1033, %v1031
        %v1046 = vpack.c.b16 %v1036, %v1034
        %v1047 = vpack.c.b16 %v1037, %v1035
        %v1048 = vpack.c.b16 %v1040, %v1038
        %v1049 = vpack.c.b16 %v1041, %v1039
        %v1059 = vsel %vm562, %v1009, 0
        %1061 = vmatpush.bf16.msra.mxu0 0
        %1062 = vmatpush.bf16.msra.mxu0 0
        %1063 = vmatpush.bf16.msra.mxu0 0
        %1064 = vmatpush.bf16.msra.mxu0 0
        %1065 = vmatpush.bf16.msra.mxu0 %v1048
        %1066 = vmatpush.bf16.msra.mxu0 %v1046
        %1067 = vmatpush.bf16.msra.mxu0 %v1044
        %1068 = vmatpush.bf16.msra.mxu0 %v1042
        %1069 = vmatmul.bf16.gmra.mxu0 %v1059
        %v1070 = vpop.f32.mrf.mxu0
        %v1071 = vadd.f32 0.0, %v1070
        %v1072 = vpop.f32.mrf.mxu0
        %v1073 = vadd.f32 0.0, %v1072
        %1074 = vdwg.mxu0
        %1075 = vmatpush.bf16.msra.mxu0 0
        %1076 = vmatpush.bf16.msra.mxu0 0
        %1077 = vmatpush.bf16.msra.mxu0 0
        %1078 = vmatpush.bf16.msra.mxu0 0
        %1079 = vmatpush.bf16.msra.mxu0 %v1049
        %1080 = vmatpush.bf16.msra.mxu0 %v1047
        %1081 = vmatpush.bf16.msra.mxu0 %v1045
        %1082 = vmatpush.bf16.msra.mxu0 %v1043
        %1083 = vmatmul.bf16.gmra.mxu0 %v1059
        %v1084 = vpop.f32.mrf.mxu0
        %v1085 = vadd.f32 0.0, %v1084
        %v1086 = vpop.f32.mrf.mxu0
        %v1087 = vadd.f32 0.0, %v1086
        %1088 = vdwg.mxu0
        %v1089 = vxor.u32 %v1071, 2147483648
        %v1090 = vxor.u32 %v1073, 2147483648
        %v1091 = vmul.f32 %v1089, 1.442695
        %v1092 = vpow.pop %v1091
        %v1093 = vmul.f32 %v1090, 1.442695
        %v1094 = vpow.pop %v1093
        %v1095 = vadd.f32 %v1092, 1.0
        %v1096 = vadd.f32 %v1094, 1.0
        %v1097 = vrcp.pop %v1095
        %v1098 = vmul.f32 %v1095, %v1097
        %v1099 = vsub.f32 1.0, %v1098
        %v1100 = vmul.f32 %v1097, %v1099
        %v1101 = vadd.f32 %v1097, %v1100
        %vm1102 = vweird.f32 %v1095
        %vm1103 = vweird.f32 %v1097
        %vm1104 = vmor %vm1102, %vm1103
        %v1105 = vsel %vm1104, %v1097, %v1101
        %v1106 = vand.u32 2147483647, %v1095
        %vm1107 = vcmp.eq.f32.partialorder %v1106, 8.507059e+37
        %v1108 = vand.u32 %v1095, 2147483648
        %v1109 = vor.u32 1.1754944e-38, %v1108
        %v1110 = vsel %vm1107, %v1109, %v1105
        %v1111 = vmul.f32 1.0, %v1110
        %v1112 = vrcp.pop %v1096
        %v1113 = vmul.f32 %v1096, %v1112
        %v1114 = vsub.f32 1.0, %v1113
        %v1115 = vmul.f32 %v1112, %v1114
        %v1116 = vadd.f32 %v1112, %v1115
        %vm1117 = vweird.f32 %v1096
        %vm1118 = vweird.f32 %v1112
        %vm1119 = vmor %vm1117, %vm1118
        %v1120 = vsel %vm1119, %v1112, %v1116
        %v1121 = vand.u32 2147483647, %v1096
        %vm1122 = vcmp.eq.f32.partialorder %v1121, 8.507059e+37
        %v1123 = vand.u32 %v1096, 2147483648
        %v1124 = vor.u32 1.1754944e-38, %v1123
        %v1125 = vsel %vm1122, %v1124, %v1120
        %v1126 = vmul.f32 1.0, %v1125
        %v1127 = vmul.f32 %v1071, %v1111
        %v1128 = vmul.f32 %v1073, %v1126
        %v1129 = vmul.f32 %v1127, %v1085
        %v1130 = vmul.f32 %v1128, %v1087
        %v1131 = vpack.c.bf16 %v1130, %v1129
        %v1132 = vld [vmem:[%s540] sm:$0xf]
        %v1133 = vld [vmem:[%s540 + $0x4] sm:$0xf]
        %v1134 = vld [vmem:[%s540 + $0x8] sm:$0xf]
        %v1135 = vld [vmem:[%s540 + $0xc] sm:$0xf]
        %v1136 = vld [vmem:[%s540 + $0x10] sm:$0xf]
        %v1137 = vld [vmem:[%s540 + $0x14] sm:$0xf]
        %v1138 = vld [vmem:[%s540 + $0x18] sm:$0xf]
        %v1139 = vld [vmem:[%s540 + $0x1c] sm:$0xf]
        %v1140 = vld [vmem:[%s540 + $0x20] sm:$0xf]
        %v1141 = vld [vmem:[%s540 + $0x24] sm:$0xf]
        %v1142 = vld [vmem:[%s540 + $0x28] sm:$0xf]
        %v1143 = vld [vmem:[%s540 + $0x2c] sm:$0xf]
        %v1144 = vld [vmem:[%s540 + $0x30] sm:$0xf]
        %v1145 = vld [vmem:[%s540 + $0x34] sm:$0xf]
        %v1146 = vld [vmem:[%s540 + $0x38] sm:$0xf]
        %v1147 = vld [vmem:[%s540 + $0x3c] sm:$0xf]
        %v1164 = vunpack.c.l.b16 %v1132
        %v1165 = vunpack.c.l.b16 %v1133
        %v1166 = vunpack.c.l.b16 %v1134
        %v1167 = vunpack.c.l.b16 %v1135
        %v1168 = vunpack.c.l.b16 %v1136
        %v1169 = vunpack.c.l.b16 %v1137
        %v1170 = vunpack.c.l.b16 %v1138
        %v1171 = vunpack.c.l.b16 %v1139
        %v1172 = vunpack.c.l.b16 %v1140
        %v1173 = vunpack.c.l.b16 %v1141
        %v1174 = vunpack.c.l.b16 %v1142
        %v1175 = vunpack.c.l.b16 %v1143
        %v1176 = vunpack.c.l.b16 %v1144
        %v1177 = vunpack.c.l.b16 %v1145
        %v1178 = vunpack.c.l.b16 %v1146
        %v1179 = vunpack.c.l.b16 %v1147
        %v1180 = vpack.c.b16 %v1165, %v1164
        %v1181 = vpack.c.b16 %v1167, %v1166
        %v1182 = vpack.c.b16 %v1169, %v1168
        %v1183 = vpack.c.b16 %v1171, %v1170
        %v1184 = vpack.c.b16 %v1173, %v1172
        %v1185 = vpack.c.b16 %v1175, %v1174
        %v1186 = vpack.c.b16 %v1177, %v1176
        %v1187 = vpack.c.b16 %v1179, %v1178
        %1196 = vmatpush.bf16.msra.mxu0 %v1187
        %1197 = vmatpush.bf16.msra.mxu0 %v1186
        %1198 = vmatpush.bf16.msra.mxu0 %v1185
        %1199 = vmatpush.bf16.msra.mxu0 %v1184
        %1200 = vmatpush.bf16.msra.mxu0 %v1183
        %1201 = vmatpush.bf16.msra.mxu0 %v1182
        %1202 = vmatpush.bf16.msra.mxu0 %v1181
        %1203 = vmatpush.bf16.msra.mxu0 %v1180
        %1204 = vmatmul.bf16.gmra.mxu0 %v1131
        %v1205 = vpop.f32.mrf.mxu0
        %v1206 = vadd.f32 0.0, %v1205
        %v1207 = vpop.f32.mrf.mxu0
        %v1208 = vadd.f32 0.0, %v1207
        %1209 = vdwg.mxu0
        %v1210 = vadd.f32 %v967, %v1206
        %v1211 = vadd.f32 %v968, %v1208
        %1212 = vst.msk [vmem:[#allocation2] sm:$0xff] %vm562, %v1210
        %1213 = vst.msk [vmem:[#allocation2 + $0x8] sm:$0xff] %vm562, %v1211
        %p1214 = scmp.eq.s32.totalorder %s28, 1
        // Predicated region
        $region89: #{tpu_custom_call.1} parent=59 // pred_check
          %p1215 = pneg %p1214
        $region90: #{tpu_custom_call.1} parent=59 // pred_check_branch
          %1217 = sbr.rel (%p1215) target = $region92
        $region91: #{tpu_custom_call.1} parent=59 // pred_region
          %1218 = vst.msk [vmem:[#allocation14] sm:$0xff] %vm562, %v1210
          %1219 = vst.msk [vmem:[#allocation14 + $0x8] sm:$0xff] %vm562, %v1211
        $region92: #{tpu_custom_call.1} parent=59 // pred_fallthru
          _
        // Predicated region
        $region93: #{tpu_custom_call.1} parent=59 // pred_check
          %p1220 = pneg %p281
        $region94: #{tpu_custom_call.1} parent=59 // pred_check_branch
          %1222 = sbr.rel (%p1220) target = $region96
        $region95: #{tpu_custom_call.1} parent=59 // pred_region
          %1224 = vsyncadd [#allocation5], 0
          %s1225 = sshll.u32 [#allocation14], 4
          %s1226 = int_to_ptr.vmem [resolvable:$true] %s1225
          %s1227 = sshll.u32 %s10, 4
          %s1228 = int_to_ptr.hbm [resolvable:$true] %s1227
          %1233 = dma.vmem_to_hbm [thread:$0]  %s1226, 256, %s1228, [#allocation5], 128, 128, 8
        $region96: #{tpu_custom_call.1} parent=59 // pred_fallthru
          _
        // Predicated region
        $region97: #{tpu_custom_call.1} parent=59 // pred_check
          %p1234 = pneg %p281
        $region98: #{tpu_custom_call.1} parent=59 // pred_check_branch
          %1236 = sbr.rel (%p1234) target = $region100
        $region99: #{tpu_custom_call.1} parent=59 // pred_region
          %1238 = dma.done [#allocation5], 256
        $region100: #{tpu_custom_call.1} parent=59 // pred_fallthru
          _
      $region60: #{tpu_custom_call.1} parent=5 // pred_fallthru
        _
      %p1239 = scmp.le.s32.totalorder 2, %s23
      // Predicated region
      $region101: #{tpu_custom_call.1} parent=5 // pred_check
        %p1240 = pneg %p1239
      $region102: #{tpu_custom_call.1} parent=5 // pred_check_branch
        %1242 = sbr.rel (%p1240) target = $region104
      $region103: #{tpu_custom_call.1} parent=5 // pred_region
        %s1243 = ssub.s32 %s23, 2
      $region104: #{tpu_custom_call.1} parent=5 // pred_fallthru
        _
    $region6: #{tpu_custom_call.1} parent=1 // loop_footer
      %s27 = sadd.s32 1, %s23
    $region7: #{tpu_custom_call.1} parent=1 // loop_footer_branch
      %22 = sbr.rel target = $region3
    $region8: #{tpu_custom_call.1} parent=1 // loop_exit
      _
    %1244 = vsyncpa [#allocation4], 1
    %s1245 = scalar_lea.sflag [#allocation4], 1
    %1246 = vsyncpa %s1245, 1
    %1247 = vsyncpa [#allocation7], 1
    %s1248 = scalar_lea.sflag [#allocation7], 1
    %1249 = vsyncpa %s1248, 1
    %1250 = vsyncpa [#allocation10], 1
    %1251 = vsyncpa [#allocation13], 1
    %1252 = vsyncpa [#allocation5], 1
    %s1253 = scalar_lea.sflag [#allocation5], 1
    %1254 = vsyncpa %s1253, 1

</llo_original>
